<compile_context>
chip_gen: v5e
topology: v5e:2x2
jax: 0.10.0
libtpu: 0.0.40
codegen_flags: <defaults>
</compile_context>

<pallas_src>
import jax
import jax.numpy as jnp
from jax.experimental import pallas as pl
from jax.experimental.pallas import tpu as pltpu


TILE_DST = 128        # destination-node tile (sublane axis)
NEG_SLOPE = 0.01      # PyTorch F.leaky_relu default negative_slope


def _round_up(x, m):
    return ((x + m - 1) // m) * m


# ------------------------------ Pallas kernel -------------------------------

def _layer_dst_kernel(a_ref, x_ref, w_ref, b_ref, xd_ref, ws_ref, bs_ref,
                      o_ref, acc_ref):
    """One dst-node tile x one incoming edge type.

    grid = (num_dst_tiles [parallel], num_incoming_etypes [arbitrary]).

      step e:      acc += A_e[tile] @ (X_src_e @ W_eff_e + b_eff_e)
      last step:   out  = leaky_relu(acc + X_dst[tile] @ W_stat + b_stat)
    """
    e = pl.program_id(1)

    @pl.when(e == 0)
    def _():
        acc_ref[...] = jnp.zeros_like(acc_ref)

    # Message transform for this edge type (folded basis/Conv1d weights).
    x = x_ref[0].astype(jnp.bfloat16)                      # (n_src_max, in)
    w = w_ref[0].astype(jnp.bfloat16)                      # (in, out)
    wh = jnp.dot(x, w, preferred_element_type=jnp.float32) + b_ref[0]

    # Mean aggregation == row-normalized adjacency matmul; sum over edge types.
    a = a_ref[0].astype(jnp.bfloat16)                      # (tile, n_src_max)
    acc_ref[...] += jnp.dot(a, wh.astype(jnp.bfloat16),
                            preferred_element_type=jnp.float32)

    @pl.when(e == pl.num_programs(1) - 1)
    def _():
        z = (acc_ref[...]
             + jnp.dot(xd_ref[...].astype(jnp.bfloat16),
                       ws_ref[...].astype(jnp.bfloat16),
                       preferred_element_type=jnp.float32)
             + bs_ref[...])
        o_ref[...] = jnp.where(z >= 0, z, NEG_SLOPE * z)


def _fused_dst_layer(a_stack, x_stack, w_stack, b_stack, x_dst, w_stat, b_stat):
    """Fused layer forward for one destination node type."""
    n_e, n_dst, n_src = a_stack.shape
    in_dim = x_stack.shape[2]
    out_dim = w_stack.shape[2]

    tile = min(TILE_DST, _round_up(n_dst, 8))
    n_pad = _round_up(n_dst, tile)
    if n_pad != n_dst:                       # pad dst rows to a whole tile
        a_stack = jnp.pad(a_stack, ((0, 0), (0, n_pad - n_dst), (0, 0)))
        x_dst = jnp.pad(x_dst, ((0, n_pad - n_dst), (0, 0)))

    out = pl.pallas_call(
        _layer_dst_kernel,
        grid=(n_pad // tile, n_e),
        in_specs=[
            pl.BlockSpec((1, tile, n_src), lambda i, e: (e, i, 0)),     # A_e
            pl.BlockSpec((1, n_src, in_dim), lambda i, e: (e, 0, 0)),   # X_src_e
            pl.BlockSpec((1, in_dim, out_dim), lambda i, e: (e, 0, 0)), # W_eff_e
            pl.BlockSpec((1, 1, out_dim), lambda i, e: (e, 0, 0)),      # b_eff_e
            pl.BlockSpec((tile, in_dim), lambda i, e: (i, 0)),          # X_dst
            pl.BlockSpec((in_dim, out_dim), lambda i, e: (0, 0)),       # W_stat
            pl.BlockSpec((1, out_dim), lambda i, e: (0, 0)),            # b_stat
        ],
        out_specs=pl.BlockSpec((tile, out_dim), lambda i, e: (i, 0)),
        out_shape=jax.ShapeDtypeStruct((n_pad, out_dim), jnp.float32),
        scratch_shapes=[pltpu.VMEM((tile, out_dim), jnp.float32)],
        compiler_params=pltpu.CompilerParams(
            dimension_semantics=("parallel", "arbitrary")),
    )(a_stack, x_stack, w_stack, b_stack, x_dst, w_stat, b_stat)
    return out[:n_dst]


# ------------------------------- glue (JAX) ---------------------------------

def fold_params(raw, etypes):
    """Fold basis linears + Conv1d(kernel_size=1) into per-etype eff. weights."""
    ws = jnp.stack([w for (w, _) in raw["base_weight"]], 0)   # (B, in, out)
    bs = jnp.stack([b for (_, b) in raw["base_weight"]], 0)   # (B, 1, out)
    w_eff, b_eff = {}, {}
    for e in etypes:
        cw, cb = raw["edge_decompose"][e]
        w_eff[e] = jnp.einsum("b,bio->io", cw, ws)            # (in, out)
        b_eff[e] = jnp.einsum("b,bio->io", cw, bs) + cb[0]    # (1, out)
    return {"w_eff": w_eff, "b_eff": b_eff,
            "w_stat": raw["stat"][0], "b_stat": raw["stat"][1]}


def prepare_graph(graph):
    """Per-dst-type static plan: incoming etypes + padded, stacked adjacency."""
    plan = {}
    for dst in graph["ntypes"]:
        inc = [(src, e) for (src, e, d) in graph["canonical_etypes"] if d == dst]
        assert inc, "node types without incoming edges are not handled"
        n_src_max = max(graph["sizes"][src] for src, _ in inc)
        a_stack = jnp.stack(
            [jnp.pad(graph["adj"][e],
                     ((0, 0), (0, n_src_max - graph["adj"][e].shape[1])))
             for _, e in inc], 0)
        plan[dst] = {"inc": inc, "n_src_max": n_src_max, "a_stack": a_stack}
    return plan


def hetero_rgcn_layer(feat_dict, folded, graph, plan):
    out = {}
    for dst in graph["ntypes"]:
        p = plan[dst]
        n_src_max = p["n_src_max"]
        x_stack = jnp.stack(
            [jnp.pad(feat_dict[src],
                     ((0, n_src_max - feat_dict[src].shape[0]), (0, 0)))
             for src, _ in p["inc"]], 0)
        w_stack = jnp.stack([folded["w_eff"][e] for _, e in p["inc"]], 0)
        b_stack = jnp.stack([folded["b_eff"][e] for _, e in p["inc"]], 0)
        out[dst] = _fused_dst_layer(p["a_stack"], x_stack, w_stack, b_stack,
                                    feat_dict[dst], folded["w_stat"],
                                    folded["b_stat"])
    return out


def hetero_rgcn_forward(feat_dict, folded1, folded2, graph, plan):
    h1 = hetero_rgcn_layer(feat_dict, folded1, graph, plan)
    return hetero_rgcn_layer(h1, folded2, graph, plan)


# --------------------------- deterministic setup ----------------------------

def init_linear_params(key, in_dim, out_dim):
    k1, k2 = jax.random.split(key)
    w = jax.random.normal(k1, (in_dim, out_dim), jnp.float32) / jnp.sqrt(float(in_dim))
    b = jax.random.normal(k2, (1, out_dim), jnp.float32) * 0.01
    return w, b


def init_layer_params(key, in_dim, out_dim, etypes, num_bases):
    keys = jax.random.split(key, num_bases + len(etypes) + 1)
    base = [init_linear_params(keys[i], in_dim, out_dim) for i in range(num_bases)]
    edge = {}
    for j, e in enumerate(etypes):
        k1, k2 = jax.random.split(keys[num_bases + j])
        cw = jax.random.normal(k1, (num_bases,), jnp.float32) * 0.5   # Conv1d weight (1,B,1)->(B,)
        cb = jax.random.normal(k2, (1,), jnp.float32) * 0.01          # Conv1d bias (1,)
        edge[e] = (cw, cb)
    stat = init_linear_params(keys[-1], in_dim, out_dim)
    return {"base_weight": base, "edge_decompose": edge, "stat": stat}


def build_graph(key, n_user, n_item):
    canonical = [("user", "follows", "user"),
                 ("user", "buys", "item"),
                 ("item", "boughtby", "user")]
    sizes = {"user": n_user, "item": n_item}
    adj = {}
    for i, (src, e, dst) in enumerate(canonical):
        k = jax.random.fold_in(key, i)
        a = jax.random.bernoulli(k, 0.3, (sizes[dst], sizes[src])).astype(jnp.float32)
        deg = jnp.sum(a, axis=1, keepdims=True)
        adj[e] = a / jnp.maximum(deg, 1.0)     # row-normalized => mean aggregation
    return {"ntypes": ["user", "item"], "canonical_etypes": canonical,
            "sizes": sizes, "adj": adj}


# ------------------------- pure-JAX reference checks -------------------------

def _leaky(z):
    return jnp.where(z >= 0, z, NEG_SLOPE * z)


def layer_ref_folded(feat_dict, folded, graph, cast):
    """Folded-weight reference mirroring the kernel math (optional bf16 casts)."""
    out_dim = folded["w_stat"].shape[1]
    h = {nt: jnp.zeros((feat_dict[nt].shape[0], out_dim), jnp.float32)
         for nt in graph["ntypes"]}
    for (src, e, dst) in graph["canonical_etypes"]:
        wh = jnp.dot(cast(feat_dict[src]), cast(folded["w_eff"][e]),
                     preferred_element_type=jnp.float32) + folded["b_eff"][e]
        h[dst] = h[dst] + jnp.dot(cast(graph["adj"][e]), cast(wh),
                                  preferred_element_type=jnp.float32)
    return {nt: _leaky(h[nt]
                       + jnp.dot(cast(feat_dict[nt]), cast(folded["w_stat"]),
                                 preferred_element_type=jnp.float32)
                       + folded["b_stat"])
            for nt in graph["ntypes"]}


def layer_ref_basis(feat_dict, raw, graph):
    """Original basis-decomposition / Conv1d formulation (pure f32 JAX)."""
    whv = {nt: jnp.stack([feat_dict[nt] @ w + b for (w, b) in raw["base_weight"]], 1)
           for nt in graph["ntypes"]}
    out_dim = raw["base_weight"][0][0].shape[1]
    h = {nt: jnp.zeros((feat_dict[nt].shape[0], out_dim), jnp.float32)
         for nt in graph["ntypes"]}
    for (src, e, dst) in graph["canonical_etypes"]:
        cw, cb = raw["edge_decompose"][e]
        wh = jnp.einsum("nbd,b->nd", whv[src], cw) + cb[0]
        h[dst] = h[dst] + graph["adj"][e] @ wh
    w, b = raw["stat"]
    return {nt: _leaky(h[nt] + feat_dict[nt] @ w + b) for nt in graph["ntypes"]}


# ----------------------------------- main ------------------------------------

if __name__ == "__main__":
    key = jax.random.PRNGKey(0)

    # lane-dense small config: dims multiples of 128, dst node counts multiples of 128
    in_size, hidden_size, out_size = 128, 128, 128
    etypes = ["follows", "buys", "boughtby"]
    num_bases = 2                                  # 0 < num_bases < num_rels -> basis path
    n_user, n_item = 256, 384

    graph = build_graph(jax.random.fold_in(key, 100), n_user, n_item)
    plan = prepare_graph(graph)
    feat = {
        "user": jax.random.normal(jax.random.fold_in(key, 1), (n_user, in_size), jnp.float32),
        "item": jax.random.normal(jax.random.fold_in(key, 2), (n_item, in_size), jnp.float32),
    }
    raw1 = init_layer_params(jax.random.fold_in(key, 3), in_size, hidden_size, etypes, num_bases)
    raw2 = init_layer_params(jax.random.fold_in(key, 4), hidden_size, out_size, etypes, num_bases)
    folded1 = fold_params(raw1, etypes)
    folded2 = fold_params(raw2, etypes)

    out = hetero_rgcn_forward(feat, folded1, folded2, graph, plan)
    out = {k: jax.block_until_ready(v) for k, v in out.items()}

    # (1) kernel vs folded reference with identical bf16/f32 math (tight)
    cast_bf16 = lambda t: t.astype(jnp.bfloat16)
    r1 = layer_ref_folded(feat, folded1, graph, cast_bf16)
    r2 = layer_ref_folded(r1, folded2, graph, cast_bf16)
    for nt in graph["ntypes"]:
        assert out[nt].shape == (graph["sizes"][nt], out_size)
        assert jnp.allclose(out[nt], r2[nt], atol=1e-3, rtol=1e-3), nt

    # (2) folded-weight algebra vs original basis/Conv1d formulation (both f32)
    ident = lambda t: t
    f1 = layer_ref_folded(feat, folded1, graph, ident)
    f2 = layer_ref_folded(f1, folded2, graph, ident)
    b1 = layer_ref_basis(feat, raw1, graph)
    b2 = layer_ref_basis(b1, raw2, graph)
    for nt in graph["ntypes"]:
        assert jnp.allclose(f2[nt], b2[nt], atol=1e-4, rtol=1e-3), nt

    print("KERNEL_OK")
</pallas_src>

<mosaic_0001>
module attributes {stable_mosaic.version = 11 : i64} {
  func.func @_layer_dst_kernel(%arg0: i32, %arg1: i32, %arg2: memref<1x128x384xf32, #tpu.memory_space<vmem>>, %arg3: memref<1x384x128xf32, #tpu.memory_space<vmem>>, %arg4: memref<1x128x128xf32, #tpu.memory_space<vmem>>, %arg5: memref<1x1x128xf32, #tpu.memory_space<vmem>>, %arg6: memref<128x128xf32, #tpu.memory_space<vmem>>, %arg7: memref<128x128xf32, #tpu.memory_space<vmem>>, %arg8: memref<1x128xf32, #tpu.memory_space<vmem>>, %arg9: memref<128x128xf32, #tpu.memory_space<vmem>>, %arg10: memref<128x128xf32, #tpu.memory_space<vmem>>) attributes {dimension_semantics = [#tpu.dimension_semantics<parallel>, #tpu.dimension_semantics<arbitrary>], iteration_bounds = array<i64: 2, 2>, scalar_prefetch = 0 : i64, scratch_operands = 1 : i64, tpu.core_type = #tpu.core_type<tc>, window_params = [{transform_indices = @transform_0, window_bounds = array<i64: 1, 128, 384>}, {transform_indices = @transform_1, window_bounds = array<i64: 1, 384, 128>}, {transform_indices = @transform_2, window_bounds = array<i64: 1, 128, 128>}, {transform_indices = @transform_3, window_bounds = array<i64: 1, 1, 128>}, {transform_indices = @transform_4, window_bounds = array<i64: 128, 128>}, {pipeline_mode = #tpu.pipeline_mode<synchronous>, transform_indices = @transform_5, window_bounds = array<i64: 128, 128>}, {pipeline_mode = #tpu.pipeline_mode<synchronous>, transform_indices = @transform_6, window_bounds = array<i64: 1, 128>}, {transform_indices = @transform_7, window_bounds = array<i64: 128, 128>}]} {
    %c0_i32 = arith.constant 0 : i32
    %0 = arith.cmpi eq, %arg1, %c0_i32 : i32
    %1 = arith.extui %0 : i1 to i32
    %c0_i32_0 = arith.constant 0 : i32
    %2 = arith.cmpi ne, %1, %c0_i32_0 : i32
    scf.if %2 {
      %cst_18 = arith.constant 0.000000e+00 : f32
      %25 = vector.broadcast %cst_18 : f32 to vector<128x128xf32>
      %c0_19 = arith.constant 0 : index
      %c0_20 = arith.constant 0 : index
      %26 = vector.load %arg10[%c0_19, %c0_20] : memref<128x128xf32, #tpu.memory_space<vmem>>, vector<128x128xf32>
      tpu.vector_store %arg10[%c0_19, %c0_20], %25 {strides = array<i32>} : memref<128x128xf32, #tpu.memory_space<vmem>>, vector<128x128xf32>,
    } else {
    }
    %c0 = arith.constant 0 : index
    %c0_1 = arith.constant 0 : index
    %c0_2 = arith.constant 0 : index
    %3 = vector.load %arg3[%c0, %c0_1, %c0_2] : memref<1x384x128xf32, #tpu.memory_space<vmem>>, vector<1x384x128xf32>
    %4 = vector.shape_cast %3 : vector<1x384x128xf32> to vector<384x128xf32>
    %5 = arith.truncf %4 : vector<384x128xf32> to vector<384x128xbf16>
    %c0_3 = arith.constant 0 : index
    %c0_4 = arith.constant 0 : index
    %c0_5 = arith.constant 0 : index
    %6 = vector.load %arg4[%c0_3, %c0_4, %c0_5] : memref<1x128x128xf32, #tpu.memory_space<vmem>>, vector<1x128x128xf32>
    %7 = vector.shape_cast %6 : vector<1x128x128xf32> to vector<128x128xf32>
    %8 = arith.truncf %7 : vector<128x128xf32> to vector<128x128xbf16>
    %cst = arith.constant dense<0.000000e+00> : vector<384x128xf32>
    %9 = tpu.matmul %5, %8, %cst {dimension_numbers = #tpu.dot_dimension_numbers<[1], [0], [0], [1], [0, 0, 1, 1], [], []>} : vector<384x128xbf16>, vector<128x128xbf16>, vector<384x128xf32> -> vector<384x128xf32>
    %c0_6 = arith.constant 0 : index
    %c0_7 = arith.constant 0 : index
    %c0_8 = arith.constant 0 : index
    %10 = vector.load %arg5[%c0_6, %c0_7, %c0_8] : memref<1x1x128xf32, #tpu.memory_space<vmem>>, vector<1x1x128xf32>
    %11 = vector.shape_cast %10 : vector<1x1x128xf32> to vector<1x128xf32>
    %12 = vector.broadcast %11 : vector<1x128xf32> to vector<384x128xf32>
    %13 = arith.addf %9, %12 : vector<384x128xf32>
    %c0_9 = arith.constant 0 : index
    %c0_10 = arith.constant 0 : index
    %c0_11 = arith.constant 0 : index
    %14 = vector.load %arg2[%c0_9, %c0_10, %c0_11] : memref<1x128x384xf32, #tpu.memory_space<vmem>>, vector<1x128x384xf32>
    %15 = vector.shape_cast %14 : vector<1x128x384xf32> to vector<128x384xf32>
    %16 = arith.truncf %15 : vector<128x384xf32> to vector<128x384xbf16>
    %c0_12 = arith.constant 0 : index
    %c0_13 = arith.constant 0 : index
    %17 = vector.load %arg10[%c0_12, %c0_13] : memref<128x128xf32, #tpu.memory_space<vmem>>, vector<128x128xf32>
    %18 = arith.truncf %13 : vector<384x128xf32> to vector<384x128xbf16>
    %cst_14 = arith.constant dense<0.000000e+00> : vector<128x128xf32>
    %19 = tpu.matmul %16, %18, %cst_14 {dimension_numbers = #tpu.dot_dimension_numbers<[1], [0], [0], [1], [0, 0, 1, 1], [], []>} : vector<128x384xbf16>, vector<384x128xbf16>, vector<128x128xf32> -> vector<128x128xf32>
    %20 = arith.addf %17, %19 : vector<128x128xf32>
    %c0_15 = arith.constant 0 : index
    %c0_16 = arith.constant 0 : index
    %21 = vector.load %arg10[%c0_15, %c0_16] : memref<128x128xf32, #tpu.memory_space<vmem>>, vector<128x128xf32>
    tpu.vector_store %arg10[%c0_15, %c0_16], %20 {strides = array<i32>} : memref<128x128xf32, #tpu.memory_space<vmem>>, vector<128x128xf32>,
    %c1_i32 = arith.constant 1 : i32
    %22 = arith.cmpi eq, %arg1, %c1_i32 : i32
    %23 = arith.extui %22 : i1 to i32
    %c0_i32_17 = arith.constant 0 : i32
    %24 = arith.cmpi ne, %23, %c0_i32_17 : i32
    scf.if %24 {
      %c0_18 = arith.constant 0 : index
      %c0_19 = arith.constant 0 : index
      %25 = vector.load %arg10[%c0_18, %c0_19] : memref<128x128xf32, #tpu.memory_space<vmem>>, vector<128x128xf32>
      %c0_20 = arith.constant 0 : index
      %c0_21 = arith.constant 0 : index
      %26 = vector.load %arg6[%c0_20, %c0_21] : memref<128x128xf32, #tpu.memory_space<vmem>>, vector<128x128xf32>
      %27 = arith.truncf %26 : vector<128x128xf32> to vector<128x128xbf16>
      %c0_22 = arith.constant 0 : index
      %c0_23 = arith.constant 0 : index
      %28 = vector.load %arg7[%c0_22, %c0_23] : memref<128x128xf32, #tpu.memory_space<vmem>>, vector<128x128xf32>
      %29 = arith.truncf %28 : vector<128x128xf32> to vector<128x128xbf16>
      %cst_24 = arith.constant dense<0.000000e+00> : vector<128x128xf32>
      %30 = tpu.matmul %27, %29, %cst_24 {dimension_numbers = #tpu.dot_dimension_numbers<[1], [0], [0], [1], [0, 0, 1, 1], [], []>} : vector<128x128xbf16>, vector<128x128xbf16>, vector<128x128xf32> -> vector<128x128xf32>
      %31 = arith.addf %25, %30 : vector<128x128xf32>
      %c0_25 = arith.constant 0 : index
      %c0_26 = arith.constant 0 : index
      %32 = vector.load %arg8[%c0_25, %c0_26] : memref<1x128xf32, #tpu.memory_space<vmem>>, vector<1x128xf32>
      %33 = vector.broadcast %32 : vector<1x128xf32> to vector<128x128xf32>
      %34 = arith.addf %31, %33 : vector<128x128xf32>
      %cst_27 = arith.constant 0.000000e+00 : f32
      %35 = vector.broadcast %cst_27 : f32 to vector<128x128xf32>
      %36 = arith.cmpf oge, %34, %35 : vector<128x128xf32>
      %cst_28 = arith.constant 0.00999999977 : f32
      %37 = vector.broadcast %cst_28 : f32 to vector<128x128xf32>
      %38 = arith.mulf %37, %34 : vector<128x128xf32>
      %39 = arith.select %36, %34, %38 : vector<128x128xi1>, vector<128x128xf32>
      %c0_29 = arith.constant 0 : index
      %c0_30 = arith.constant 0 : index
      %40 = vector.load %arg9[%c0_29, %c0_30] : memref<128x128xf32, #tpu.memory_space<vmem>>, vector<128x128xf32>
      tpu.vector_store %arg9[%c0_29, %c0_30], %39 {strides = array<i32>} : memref<128x128xf32, #tpu.memory_space<vmem>>, vector<128x128xf32>,
    } else {
    }
    return
  }
  func.func @transform_0(%arg0: i32, %arg1: i32) -> (i32, i32, i32) {
    %c0_i32 = arith.constant 0 : i32
    %c0_i32_0 = arith.constant 0 : i32
    return %arg1, %arg0, %c0_i32 : i32, i32, i32
  }
  func.func @transform_1(%arg0: i32, %arg1: i32) -> (i32, i32, i32) {
    %c0_i32 = arith.constant 0 : i32
    %c0_i32_0 = arith.constant 0 : i32
    %c0_i32_1 = arith.constant 0 : i32
    return %arg1, %c0_i32, %c0_i32_0 : i32, i32, i32
  }
  func.func @transform_2(%arg0: i32, %arg1: i32) -> (i32, i32, i32) {
    %c0_i32 = arith.constant 0 : i32
    %c0_i32_0 = arith.constant 0 : i32
    %c0_i32_1 = arith.constant 0 : i32
    return %arg1, %c0_i32, %c0_i32_0 : i32, i32, i32
  }
  func.func @transform_3(%arg0: i32, %arg1: i32) -> (i32, i32, i32) {
    %c0_i32 = arith.constant 0 : i32
    %c0_i32_0 = arith.constant 0 : i32
    %c0_i32_1 = arith.constant 0 : i32
    return %arg1, %c0_i32, %c0_i32_0 : i32, i32, i32
  }
  func.func @transform_4(%arg0: i32, %arg1: i32) -> (i32, i32) {
    %c0_i32 = arith.constant 0 : i32
    %c0_i32_0 = arith.constant 0 : i32
    return %arg0, %c0_i32 : i32, i32
  }
  func.func @transform_5(%arg0: i32, %arg1: i32) -> (i32, i32) {
    %c0_i32 = arith.constant 0 : i32
    %c0_i32_0 = arith.constant 0 : i32
    %c0_i32_1 = arith.constant 0 : i32
    return %c0_i32, %c0_i32_0 : i32, i32
  }
  func.func @transform_6(%arg0: i32, %arg1: i32) -> (i32, i32) {
    %c0_i32 = arith.constant 0 : i32
    %c0_i32_0 = arith.constant 0 : i32
    %c0_i32_1 = arith.constant 0 : i32
    return %c0_i32, %c0_i32_0 : i32, i32
  }
  func.func @transform_7(%arg0: i32, %arg1: i32) -> (i32, i32) {
    %c0_i32 = arith.constant 0 : i32
    %c0_i32_0 = arith.constant 0 : i32
    return %arg0, %c0_i32 : i32, i32
  }
}

</mosaic_0001>

<llo_original>
// kernel: tpu_custom_call.1
$region0: #{tpu_custom_call.1}
  #allocation0 [shape = 'u32[]', space=smem, size = 0x4, offset = 0x4, fixed_abs, tag = 'smem constant byte address 0x4 - core index']
  #allocation1 [shape = 'u32[72,128]{1,0:T(1,128)}', space=vmem, size = 0x9000, scoped, tag = 'internal scratch']
  #allocation2 [shape = 'f32[128,128]{1,0:T(8,128)}', space=vmem, size = 0x10000, scoped, tag = 'scratch operand']
  %s0 = inlined_call_operand.hbm [shape: f32[2,256,384], index: 0, kind: input, shape index: {}]
  %s1 = inlined_call_operand.hbm [shape: f32[2,384,128], index: 1, kind: input, shape index: {}]
  %s2 = inlined_call_operand.hbm [shape: f32[2,128,128], index: 2, kind: input, shape index: {}]
  %s3 = inlined_call_operand.vmem [shape: f32[2,1,128], index: 3, kind: input, shape index: {}]
  %s4 = inlined_call_operand.hbm [shape: f32[256,128], index: 4, kind: input, shape index: {}]
  %s5 = inlined_call_operand.hbm [shape: f32[128,128], index: 5, kind: input, shape index: {}]
  %s6 = inlined_call_operand.vmem [shape: f32[1,128], index: 6, kind: input, shape index: {}]
  %s7 = inlined_call_operand.hbm [shape: f32[256,128], index: 7, kind: output, shape index: {}]
  %s8 = sld [smem:[#allocation0]]
  $region89: #{tpu_custom_call.1} parent=0
    _
  %s10 = ssub.s32 1, %s8
  %s11 = scalar_select 0, %s10, %s8
  $region1: #{tpu_custom_call.1} parent=0
    #allocation3 [shape = 'u8[393216]{0}', space=vmem, size = 0x60000, scoped, tag = 'input window, operand 0']
    #allocation4 [shape = 's32[2]{0}', space=sflag, size = 0x8, scoped, tag = 'scoped memory for tpu_custom_call.1']
    #allocation5 [shape = 's32[2]{0}', space=sflag, size = 0x8, scoped, tag = 'scoped memory for tpu_custom_call.1']
    #allocation6 [shape = 'u8[393216]{0}', space=vmem, size = 0x60000, scoped, tag = 'input window, operand 1']
    #allocation7 [shape = 's32[2]{0}', space=sflag, size = 0x8, scoped, tag = 'scoped memory for tpu_custom_call.1']
    #allocation8 [shape = 'u8[131072]{0}', space=vmem, size = 0x20000, scoped, tag = 'input window, operand 2']
    #allocation9 [shape = 'u8[131072]{0}', space=vmem, size = 0x20000, scoped, tag = 'input window, operand 4']
    #allocation10 [shape = 's32[2]{0}', space=sflag, size = 0x8, scoped, tag = 'scoped memory for tpu_custom_call.1']
    #allocation11 [shape = 'u8[65536]{0}', space=vmem, size = 0x10000, scoped, tag = 'input window, operand 5, single buffered']
    #allocation12 [shape = 'u8[131072]{0}', space=vmem, size = 0x20000, scoped, tag = 'output window, operand 0']
    %12 = vsyncpa [#allocation4], 0
    %s13 = scalar_lea.sflag [#allocation4], 1
    %14 = vsyncpa %s13, 0
    %15 = vsyncpa [#allocation7], 0
    %s16 = scalar_lea.sflag [#allocation7], 1
    %17 = vsyncpa %s16, 0
    %18 = vsyncpa [#allocation10], 0
    %s19 = scalar_lea.sflag [#allocation10], 1
    %20 = vsyncpa %s19, 0
    %21 = vsyncpa [#allocation5], 0
    %s22 = scalar_lea.sflag [#allocation5], 1
    %23 = vsyncpa %s22, 0
    loop: start=0, step=1, limit=6
    $region2: #{tpu_custom_call.1} parent=1 // loop_pre_header
      _
    $region3: #{tpu_custom_call.1} parent=1 // loop_header
      %s25 = sphi 0, %s29
      %p26 = scmp.ge.s32.totalorder %s25, 6
      %s32 = sphi 0, %s44
      %s33 = sphi 0, %s40
      %s34 = sphi 0, %s32
      %s35 = sphi 0, %s33
      %s36 = sphi 0, %s34
      %s37 = sphi 0, %s35
      %s49 = sphi 0, %s51
      %s52 = sphi 0, %s49
      %s53 = sphi 0, %s52
      %s69 = sphi 0, %s53
      %s75 = sphi 0, %s77
      %s78 = sphi 0, %s75
      %s79 = sphi 0, %s78
      %s95 = sphi 0, %s79
      %s101 = sphi 0, %s103
      %s104 = sphi 0, %s101
      %s105 = sphi 0, %s104
      %s121 = sphi 0, %s105
      %s127 = sphi 0, %s129
      %s130 = sphi 0, %s127
      %s131 = sphi 0, %s130
      %s147 = sphi 0, %s131
      %s153 = sphi 0, %s155
      %s156 = sphi 0, %s153
      %s157 = sphi 0, %s156
      %s173 = sphi 0, %s157
      %s177 = sphi 0, %s177
      %s179 = sphi 0, %s177
      %s180 = sphi 0, %s179
      %s194 = sphi 0, %s180
      %s198 = sphi 0, %s198
      %s200 = sphi 0, %s198
      %s201 = sphi 0, %s200
      %s215 = sphi 0, %s201
      %s221 = sphi 0, %s223
      %s224 = sphi 0, %s221
      %s225 = sphi 0, %s224
      %s241 = sphi 0, %s225
    $region4: #{tpu_custom_call.1} parent=1 // loop_header_branch
      %28 = sbr.rel (%p26) target = $region8
    $region5: #{tpu_custom_call.1} parent=1 // loop_body
      %s30 = ssub.s32 %s25, 1
      %s31 = ssub.s32 %s25, 2
      %s38 = sadd.s32 1, %s33
      %p39 = scmp.ge.s32.totalorder %s38, 2
      %s40 = scalar_select %p39, 0, %s38
      %s41 = sadd.s32 1, %s32
      %s42 = scalar_select %p39, %s41, %s32
      %p43 = scmp.ge.s32.totalorder %s42, 2
      %s44 = scalar_select %p43, 0, %s42
      %s45 = ssub.s32 %s33, %s40
      %s46 = ssub.s32 %s32, %s44
      %s47 = sor.u32 %s45, %s46
      %p48 = scmp.eq.s32.totalorder %s47, 0
      %s50 = sadd.s32 %s49, 1
      %s51 = scalar_select %p48, %s49, %s50
      %p54 = pneg %p48
      %p55 = scmp.eq.s32.totalorder %s25, 3
      %p56 = por %p54, %p55
      %p57 = scmp.ne.s32.totalorder %s49, %s52
      %p58 = scmp.eq.s32.totalorder %s25, 0
      %p59 = por %p57, %p58
      %p60 = scmp.ne.s32.totalorder %s49, %s52
      %p61 = scmp.eq.s32.totalorder %s30, 3
      %p62 = por %p60, %p61
      %p63 = scmp.ne.s32.totalorder %s52, %s53
      %p64 = scmp.eq.s32.totalorder %s30, 0
      %p65 = por %p63, %p64
      %p66 = scmp.ne.s32.totalorder %s52, %s53
      %p67 = scmp.eq.s32.totalorder %s31, 3
      %p68 = por %p66, %p67
      %p70 = scmp.ne.s32.totalorder %s53, %s69
      %p71 = scmp.eq.s32.totalorder %s31, 0
      %p72 = por %p70, %p71
      %s73 = ssub.s32 %s33, %s40
      %p74 = scmp.eq.s32.totalorder %s73, 0
      %s76 = sadd.s32 %s75, 1
      %s77 = scalar_select %p74, %s75, %s76
      %p80 = pneg %p74
      %p81 = scmp.eq.s32.totalorder %s25, 3
      %p82 = por %p80, %p81
      %p83 = scmp.ne.s32.totalorder %s75, %s78
      %p84 = scmp.eq.s32.totalorder %s25, 0
      %p85 = por %p83, %p84
      %p86 = scmp.ne.s32.totalorder %s75, %s78
      %p87 = scmp.eq.s32.totalorder %s30, 3
      %p88 = por %p86, %p87
      %p89 = scmp.ne.s32.totalorder %s78, %s79
      %p90 = scmp.eq.s32.totalorder %s30, 0
      %p91 = por %p89, %p90
      %p92 = scmp.ne.s32.totalorder %s78, %s79
      %p93 = scmp.eq.s32.totalorder %s31, 3
      %p94 = por %p92, %p93
      %p96 = scmp.ne.s32.totalorder %s79, %s95
      %p97 = scmp.eq.s32.totalorder %s31, 0
      %p98 = por %p96, %p97
      %s99 = ssub.s32 %s33, %s40
      %p100 = scmp.eq.s32.totalorder %s99, 0
      %s102 = sadd.s32 %s101, 1
      %s103 = scalar_select %p100, %s101, %s102
      %p106 = pneg %p100
      %p107 = scmp.eq.s32.totalorder %s25, 3
      %p108 = por %p106, %p107
      %p109 = scmp.ne.s32.totalorder %s101, %s104
      %p110 = scmp.eq.s32.totalorder %s25, 0
      %p111 = por %p109, %p110
      %p112 = scmp.ne.s32.totalorder %s101, %s104
      %p113 = scmp.eq.s32.totalorder %s30, 3
      %p114 = por %p112, %p113
      %p115 = scmp.ne.s32.totalorder %s104, %s105
      %p116 = scmp.eq.s32.totalorder %s30, 0
      %p117 = por %p115, %p116
      %p118 = scmp.ne.s32.totalorder %s104, %s105
      %p119 = scmp.eq.s32.totalorder %s31, 3
      %p120 = por %p118, %p119
      %p122 = scmp.ne.s32.totalorder %s105, %s121
      %p123 = scmp.eq.s32.totalorder %s31, 0
      %p124 = por %p122, %p123
      %s125 = ssub.s32 %s33, %s40
      %p126 = scmp.eq.s32.totalorder %s125, 0
      %s128 = sadd.s32 %s127, 1
      %s129 = scalar_select %p126, %s127, %s128
      %p132 = pneg %p126
      %p133 = scmp.eq.s32.totalorder %s25, 3
      %p134 = por %p132, %p133
      %p135 = scmp.ne.s32.totalorder %s127, %s130
      %p136 = scmp.eq.s32.totalorder %s25, 0
      %p137 = por %p135, %p136
      %p138 = scmp.ne.s32.totalorder %s127, %s130
      %p139 = scmp.eq.s32.totalorder %s30, 3
      %p140 = por %p138, %p139
      %p141 = scmp.ne.s32.totalorder %s130, %s131
      %p142 = scmp.eq.s32.totalorder %s30, 0
      %p143 = por %p141, %p142
      %p144 = scmp.ne.s32.totalorder %s130, %s131
      %p145 = scmp.eq.s32.totalorder %s31, 3
      %p146 = por %p144, %p145
      %p148 = scmp.ne.s32.totalorder %s131, %s147
      %p149 = scmp.eq.s32.totalorder %s31, 0
      %p150 = por %p148, %p149
      %s151 = ssub.s32 %s32, %s44
      %p152 = scmp.eq.s32.totalorder %s151, 0
      %s154 = sadd.s32 %s153, 1
      %s155 = scalar_select %p152, %s153, %s154
      %p158 = pneg %p152
      %p159 = scmp.eq.s32.totalorder %s25, 3
      %p160 = por %p158, %p159
      %p161 = scmp.ne.s32.totalorder %s153, %s156
      %p162 = scmp.eq.s32.totalorder %s25, 0
      %p163 = por %p161, %p162
      %p164 = scmp.ne.s32.totalorder %s153, %s156
      %p165 = scmp.eq.s32.totalorder %s30, 3
      %p166 = por %p164, %p165
      %p167 = scmp.ne.s32.totalorder %s156, %s157
      %p168 = scmp.eq.s32.totalorder %s30, 0
      %p169 = por %p167, %p168
      %p170 = scmp.ne.s32.totalorder %s156, %s157
      %p171 = scmp.eq.s32.totalorder %s31, 3
      %p172 = por %p170, %p171
      %p174 = scmp.ne.s32.totalorder %s157, %s173
      %p175 = scmp.eq.s32.totalorder %s31, 0
      %p176 = por %p174, %p175
      %s178 = sadd.s32 %s177, 1
      %p181 = scmp.eq.s32.totalorder %s25, 3
      %p182 = scmp.ne.s32.totalorder %s177, %s179
      %p183 = scmp.eq.s32.totalorder %s25, 0
      %p184 = por %p182, %p183
      %p185 = scmp.ne.s32.totalorder %s177, %s179
      %p186 = scmp.eq.s32.totalorder %s30, 3
      %p187 = por %p185, %p186
      %p188 = scmp.ne.s32.totalorder %s179, %s180
      %p189 = scmp.eq.s32.totalorder %s30, 0
      %p190 = por %p188, %p189
      %p191 = scmp.ne.s32.totalorder %s179, %s180
      %p192 = scmp.eq.s32.totalorder %s31, 3
      %p193 = por %p191, %p192
      %p195 = scmp.ne.s32.totalorder %s180, %s194
      %p196 = scmp.eq.s32.totalorder %s31, 0
      %p197 = por %p195, %p196
      %s199 = sadd.s32 %s198, 1
      %p202 = scmp.eq.s32.totalorder %s25, 3
      %p203 = scmp.ne.s32.totalorder %s198, %s200
      %p204 = scmp.eq.s32.totalorder %s25, 0
      %p205 = por %p203, %p204
      %p206 = scmp.ne.s32.totalorder %s198, %s200
      %p207 = scmp.eq.s32.totalorder %s30, 3
      %p208 = por %p206, %p207
      %p209 = scmp.ne.s32.totalorder %s200, %s201
      %p210 = scmp.eq.s32.totalorder %s30, 0
      %p211 = por %p209, %p210
      %p212 = scmp.ne.s32.totalorder %s200, %s201
      %p213 = scmp.eq.s32.totalorder %s31, 3
      %p214 = por %p212, %p213
      %p216 = scmp.ne.s32.totalorder %s201, %s215
      %p217 = scmp.eq.s32.totalorder %s31, 0
      %p218 = por %p216, %p217
      %s219 = ssub.s32 %s32, %s44
      %p220 = scmp.eq.s32.totalorder %s219, 0
      %s222 = sadd.s32 %s221, 1
      %s223 = scalar_select %p220, %s221, %s222
      %p226 = pneg %p220
      %p227 = scmp.eq.s32.totalorder %s25, 3
      %p228 = por %p226, %p227
      %p229 = scmp.ne.s32.totalorder %s221, %s224
      %p230 = scmp.eq.s32.totalorder %s25, 0
      %p231 = por %p229, %p230
      %p232 = scmp.ne.s32.totalorder %s221, %s224
      %p233 = scmp.eq.s32.totalorder %s30, 3
      %p234 = por %p232, %p233
      %p235 = scmp.ne.s32.totalorder %s224, %s225
      %p236 = scmp.eq.s32.totalorder %s30, 0
      %p237 = por %p235, %p236
      %p238 = scmp.ne.s32.totalorder %s224, %s225
      %p239 = scmp.eq.s32.totalorder %s31, 3
      %p240 = por %p238, %p239
      %p242 = scmp.ne.s32.totalorder %s225, %s241
      %p243 = scmp.eq.s32.totalorder %s31, 0
      %p244 = por %p242, %p243
      %p245 = scmp.le.s32.totalorder 1, %s25
      %p246 = scmp.lt.s32.totalorder %s25, 5
      %p247 = pnand %p245, %p246
      %p248 = pneg %p247
      // Predicated region
      $region9: #{tpu_custom_call.1} parent=5 // pred_check
        _
      $region10: #{tpu_custom_call.1} parent=5 // pred_check_branch
        %250 = sbr.rel (%p247) target = $region12
      $region11: #{tpu_custom_call.1} parent=5 // pred_region
        %s251 = ssub.s32 %s25, 1
        // Predicated region
        $region13: #{tpu_custom_call.1} parent=11 // pred_check
          %p252 = pneg %p190
        $region14: #{tpu_custom_call.1} parent=11 // pred_check_branch
          %254 = sbr.rel (%p252) target = $region16
        $region15: #{tpu_custom_call.1} parent=11 // pred_region
          %256 = vsyncadd [#allocation10], 0
          %s257 = sshll.u32 %s5, 4
          %s258 = int_to_ptr.hbm [resolvable:$true] %s257
          %s259 = sshll.u32 [#allocation11], 4
          %s260 = int_to_ptr.vmem [resolvable:$true] %s259
          %265 = dma.hbm_to_vmem [thread:$0]  %s258, 2048, %s260, [#allocation10], 128, 128, 8
        $region16: #{tpu_custom_call.1} parent=11 // pred_fallthru
          _
        // Predicated region
        $region17: #{tpu_custom_call.1} parent=11 // pred_check
          %p266 = pneg %p211
        $region18: #{tpu_custom_call.1} parent=11 // pred_check_branch
          %268 = sbr.rel (%p266) target = $region20
        $region19: #{tpu_custom_call.1} parent=11 // pred_region
          _
        $region20: #{tpu_custom_call.1} parent=11 // pred_fallthru
          _
      $region12: #{tpu_custom_call.1} parent=5 // pred_fallthru
        _
      %p269 = scmp.lt.s32.totalorder %s25, 4
      // Predicated region
      $region21: #{tpu_custom_call.1} parent=5 // pred_check
        %p270 = pneg %p269
      $region22: #{tpu_custom_call.1} parent=5 // pred_check_branch
        %272 = sbr.rel (%p270) target = $region24
      $region23: #{tpu_custom_call.1} parent=5 // pred_region
        // Predicated region
        $region25: #{tpu_custom_call.1} parent=23 // pred_check
          %p273 = pneg %p59
        $region26: #{tpu_custom_call.1} parent=23 // pred_check_branch
          %275 = sbr.rel (%p273) target = $region28
        $region27: #{tpu_custom_call.1} parent=23 // pred_region
          %s276 = sand.u32 %s49, 1
          %s277 = scalar_lea.sflag [#allocation4], %s276
          %s278 = sand.u32 %s49, 1
          %s279 = smul.addr %s278, 384
          %s280 = scalar_lea.vmem [#allocation3], %s279
          %s281 = smul.u32 16, %s32
          %283 = vsyncadd %s277, 0
          %s284 = smul.addr %s281, 3
          %s285 = smul.addr %s33, 96
          %s286 = sadd.s32 %s284, %s285
          %s287 = smul.addr %s286, 8
          %s288 = scalar_lea.hbm %s0, %s287
          %s289 = sshll.u32 %s288, 4
          %s290 = int_to_ptr.hbm [resolvable:$true] %s289
          %s291 = sshll.u32 %s280, 4
          %s292 = int_to_ptr.vmem [resolvable:$true] %s291
          %297 = dma.hbm_to_vmem [thread:$0]  %s290, 6144, %s292, %s277, 384, 384, 24
        $region28: #{tpu_custom_call.1} parent=23 // pred_fallthru
          _
        // Predicated region
        $region29: #{tpu_custom_call.1} parent=23 // pred_check
          %p298 = pneg %p85
        $region30: #{tpu_custom_call.1} parent=23 // pred_check_branch
          %300 = sbr.rel (%p298) target = $region32
        $region31: #{tpu_custom_call.1} parent=23 // pred_region
          %s301 = sand.u32 %s25, 1
          %s302 = scalar_lea.sflag [#allocation7], %s301
          %s303 = sand.u32 %s75, 1
          %s304 = smul.addr %s303, 384
          %s305 = scalar_lea.vmem [#allocation6], %s304
          %307 = vsyncadd %s302, 0
          %s308 = smul.addr %s33, 48
          %s309 = smul.addr %s308, 8
          %s310 = scalar_lea.hbm %s1, %s309
          %s311 = sshll.u32 %s310, 4
          %s312 = int_to_ptr.hbm [resolvable:$true] %s311
          %s313 = sshll.u32 %s305, 4
          %s314 = int_to_ptr.vmem [resolvable:$true] %s313
          %319 = dma.hbm_to_vmem [thread:$0]  %s312, 6144, %s314, %s302, 128, 128, 8
        $region32: #{tpu_custom_call.1} parent=23 // pred_fallthru
          _
        // Predicated region
        $region33: #{tpu_custom_call.1} parent=23 // pred_check
          %p320 = pneg %p111
        $region34: #{tpu_custom_call.1} parent=23 // pred_check_branch
          %322 = sbr.rel (%p320) target = $region36
        $region35: #{tpu_custom_call.1} parent=23 // pred_region
          %s323 = sand.u32 %s25, 1
          %s324 = scalar_lea.sflag [#allocation7], %s323
          %s325 = sand.u32 %s101, 1
          %s326 = smul.addr %s325, 128
          %s327 = scalar_lea.vmem [#allocation8], %s326
          %329 = vsyncadd %s324, 0
          %s330 = smul.addr %s33, 16
          %s331 = smul.addr %s330, 8
          %s332 = scalar_lea.hbm %s2, %s331
          %s333 = sshll.u32 %s332, 4
          %s334 = int_to_ptr.hbm [resolvable:$true] %s333
          %s335 = sshll.u32 %s327, 4
          %s336 = int_to_ptr.vmem [resolvable:$true] %s335
          %341 = dma.hbm_to_vmem [thread:$0]  %s334, 2048, %s336, %s324, 128, 128, 8
        $region36: #{tpu_custom_call.1} parent=23 // pred_fallthru
          _
        // Predicated region
        $region37: #{tpu_custom_call.1} parent=23 // pred_check
          %p342 = pneg %p137
        $region38: #{tpu_custom_call.1} parent=23 // pred_check_branch
          %344 = sbr.rel (%p342) target = $region40
        $region39: #{tpu_custom_call.1} parent=23 // pred_region
          %p345 = scmp.lt.s32.totalorder %s33, 1
          %s346 = scalar_select %p345, %s33, 1
          %s347 = scalar_lea.vmem %s3, %s346
        $region40: #{tpu_custom_call.1} parent=23 // pred_fallthru
          _
        // Predicated region
        $region41: #{tpu_custom_call.1} parent=23 // pred_check
          %p348 = pneg %p163
        $region42: #{tpu_custom_call.1} parent=23 // pred_check_branch
          %350 = sbr.rel (%p348) target = $region44
        $region43: #{tpu_custom_call.1} parent=23 // pred_region
          %s351 = sand.u32 %s25, 1
          %s352 = scalar_lea.sflag [#allocation10], %s351
          %s353 = sand.u32 %s153, 1
          %s354 = smul.addr %s353, 128
          %s355 = scalar_lea.vmem [#allocation9], %s354
          %s356 = smul.u32 16, %s32
          %358 = vsyncadd %s352, 0
          %s359 = smul.addr %s356, 8
          %s360 = scalar_lea.hbm %s4, %s359
          %s361 = sshll.u32 %s360, 4
          %s362 = int_to_ptr.hbm [resolvable:$true] %s361
          %s363 = sshll.u32 %s355, 4
          %s364 = int_to_ptr.vmem [resolvable:$true] %s363
          %369 = dma.hbm_to_vmem [thread:$0]  %s362, 2048, %s364, %s352, 128, 128, 8
        $region44: #{tpu_custom_call.1} parent=23 // pred_fallthru
          _
      $region24: #{tpu_custom_call.1} parent=5 // pred_fallthru
        _
      %p370 = scmp.le.s32.totalorder 1, %s25
      %p371 = scmp.lt.s32.totalorder %s25, 5
      %p372 = pnand %p370, %p371
      %p373 = pneg %p372
      // Predicated region
      $region45: #{tpu_custom_call.1} parent=5 // pred_check
        _
      $region46: #{tpu_custom_call.1} parent=5 // pred_check_branch
        %375 = sbr.rel (%p372) target = $region48
      $region47: #{tpu_custom_call.1} parent=5 // pred_region
        %s376 = ssub.s32 %s25, 1
        %s377 = sand.u32 %s52, 1
        %s378 = scalar_lea.sflag [#allocation4], %s377
        %s379 = sand.u32 %s52, 1
        %s380 = smul.addr %s379, 384
        %s381 = scalar_lea.vmem [#allocation3], %s380
        // Predicated region
        $region49: #{tpu_custom_call.1} parent=47 // pred_check
          %p382 = pneg %p65
        $region50: #{tpu_custom_call.1} parent=47 // pred_check_branch
          %384 = sbr.rel (%p382) target = $region52
        $region51: #{tpu_custom_call.1} parent=47 // pred_region
          %386 = dma.done %s378, 6144
        $region52: #{tpu_custom_call.1} parent=47 // pred_fallthru
          _
        %s387 = sand.u32 %s30, 1
        %s388 = scalar_lea.sflag [#allocation7], %s387
        %s389 = sand.u32 %s78, 1
        %s390 = smul.addr %s389, 384
        %s391 = scalar_lea.vmem [#allocation6], %s390
        // Predicated region
        $region53: #{tpu_custom_call.1} parent=47 // pred_check
          %p392 = pneg %p91
        $region54: #{tpu_custom_call.1} parent=47 // pred_check_branch
          %394 = sbr.rel (%p392) target = $region56
        $region55: #{tpu_custom_call.1} parent=47 // pred_region
          %396 = dma.done %s388, 6144
        $region56: #{tpu_custom_call.1} parent=47 // pred_fallthru
          _
        %s397 = sand.u32 %s30, 1
        %s398 = scalar_lea.sflag [#allocation7], %s397
        %s399 = sand.u32 %s104, 1
        %s400 = smul.addr %s399, 128
        %s401 = scalar_lea.vmem [#allocation8], %s400
        // Predicated region
        $region57: #{tpu_custom_call.1} parent=47 // pred_check
          %p402 = pneg %p117
        $region58: #{tpu_custom_call.1} parent=47 // pred_check_branch
          %404 = sbr.rel (%p402) target = $region60
        $region59: #{tpu_custom_call.1} parent=47 // pred_region
          %406 = dma.done %s398, 2048
        $region60: #{tpu_custom_call.1} parent=47 // pred_fallthru
          _
        %s407 = sand.u32 %s30, 1
        %s408 = scalar_lea.sflag [#allocation10], %s407
        %s409 = sand.u32 %s156, 1
        %s410 = smul.addr %s409, 128
        %s411 = scalar_lea.vmem [#allocation9], %s410
        // Predicated region
        $region61: #{tpu_custom_call.1} parent=47 // pred_check
          %p412 = pneg %p169
        $region62: #{tpu_custom_call.1} parent=47 // pred_check_branch
          %414 = sbr.rel (%p412) target = $region64
        $region63: #{tpu_custom_call.1} parent=47 // pred_region
          %416 = dma.done %s408, 2048
        $region64: #{tpu_custom_call.1} parent=47 // pred_fallthru
          _
        // Predicated region
        $region65: #{tpu_custom_call.1} parent=47 // pred_check
          %p417 = pneg %p190
        $region66: #{tpu_custom_call.1} parent=47 // pred_check_branch
          %419 = sbr.rel (%p417) target = $region68
        $region67: #{tpu_custom_call.1} parent=47 // pred_region
          %421 = dma.done [#allocation10], 2048
        $region68: #{tpu_custom_call.1} parent=47 // pred_fallthru
          _
        %s422 = sand.u32 %s52, 1
        %s423 = scalar_lea.sflag [#allocation4], %s422
        %s424 = sand.u32 %s52, 1
        %s425 = smul.addr %s424, 384
        %s426 = scalar_lea.vmem [#allocation3], %s425
        %p427 = pneg %p65
        %p428 = pneg %p62
        %s429 = sand.u32 %s30, 1
        %s430 = scalar_lea.sflag [#allocation7], %s429
        %s431 = sand.u32 %s78, 1
        %s432 = smul.addr %s431, 384
        %s433 = scalar_lea.vmem [#allocation6], %s432
        %p434 = pneg %p91
        %p435 = pneg %p88
        %s436 = sand.u32 %s30, 1
        %s437 = scalar_lea.sflag [#allocation7], %s436
        %s438 = sand.u32 %s104, 1
        %s439 = smul.addr %s438, 128
        %s440 = scalar_lea.vmem [#allocation8], %s439
        %p441 = pneg %p117
        %p442 = pneg %p114
        %p443 = scmp.lt.s32.totalorder %s35, 1
        %s444 = scalar_select %p443, %s35, 1
        %s445 = scalar_lea.vmem %s3, %s444
        %p446 = pneg %p143
        %p447 = pneg %p140
        %s448 = sand.u32 %s30, 1
        %s449 = scalar_lea.sflag [#allocation10], %s448
        %s450 = sand.u32 %s156, 1
        %s451 = smul.addr %s450, 128
        %s452 = scalar_lea.vmem [#allocation9], %s451
        %p453 = pneg %p169
        %p454 = pneg %p166
        %p455 = pneg %p190
        %p456 = pneg %p187
        %p457 = pneg %p211
        %p458 = pneg %p208
        %p459 = pneg %p237
        %p460 = pneg %p234
        %s461 = sand.u32 %s224, 1
        %s462 = scalar_lea.sflag [#allocation5], %s461
        %s463 = sand.u32 %s224, 1
        %s464 = smul.addr %s463, 128
        %s465 = scalar_lea.vmem [#allocation12], %s464
        %s466 = smul.u32 16, %s34
        %p467 = scmp.lt.s32.totalorder %s35, 1
        %s468 = scalar_select %p467, %s35, 1
        %s469 = scalar_lea.vmem %s3, %s468
        %s470 = smul.u32 16, %s34
        %s471 = smul.u32 16, %s34
        %p472 = scmp.eq.s32.totalorder %s35, 0
        // Predicated region
        $region69: #{tpu_custom_call.1} parent=47 // pred_check
          %p473 = pneg %p472
        $region70: #{tpu_custom_call.1} parent=47 // pred_check_branch
          %475 = sbr.rel (%p473) target = $region72
        $region71: #{tpu_custom_call.1} parent=47 // pred_region
          %476 = vst [vmem:[#allocation2] sm:$0xff] 0.0
          %477 = vst [vmem:[#allocation2 + $0x8] sm:$0xff] 0.0
          %478 = vst [vmem:[#allocation2 + $0x10] sm:$0xff] 0.0
          %479 = vst [vmem:[#allocation2 + $0x18] sm:$0xff] 0.0
          %480 = vst [vmem:[#allocation2 + $0x20] sm:$0xff] 0.0
          %481 = vst [vmem:[#allocation2 + $0x28] sm:$0xff] 0.0
          %482 = vst [vmem:[#allocation2 + $0x30] sm:$0xff] 0.0
          %483 = vst [vmem:[#allocation2 + $0x38] sm:$0xff] 0.0
          %484 = vst [vmem:[#allocation2 + $0x40] sm:$0xff] 0.0
          %485 = vst [vmem:[#allocation2 + $0x48] sm:$0xff] 0.0
          %486 = vst [vmem:[#allocation2 + $0x50] sm:$0xff] 0.0
          %487 = vst [vmem:[#allocation2 + $0x58] sm:$0xff] 0.0
          %488 = vst [vmem:[#allocation2 + $0x60] sm:$0xff] 0.0
          %489 = vst [vmem:[#allocation2 + $0x68] sm:$0xff] 0.0
          %490 = vst [vmem:[#allocation2 + $0x70] sm:$0xff] 0.0
          %491 = vst [vmem:[#allocation2 + $0x78] sm:$0xff] 0.0
        $region72: #{tpu_custom_call.1} parent=47 // pred_fallthru
          _
        %v492 = vld [vmem:[%s391] sm:$0xff]
        %v493 = vld [vmem:[%s391 + $0x8] sm:$0xff]
        %v494 = vld [vmem:[%s391 + $0x10] sm:$0xff]
        %v495 = vld [vmem:[%s391 + $0x18] sm:$0xff]
        %v496 = vld [vmem:[%s391 + $0x20] sm:$0xff]
        %v497 = vld [vmem:[%s391 + $0x28] sm:$0xff]
        %v498 = vld [vmem:[%s391 + $0x30] sm:$0xff]
        %v499 = vld [vmem:[%s391 + $0x38] sm:$0xff]
        %v500 = vld [vmem:[%s391 + $0x40] sm:$0xff]
        %v501 = vld [vmem:[%s391 + $0x48] sm:$0xff]
        %v502 = vld [vmem:[%s391 + $0x50] sm:$0xff]
        %v503 = vld [vmem:[%s391 + $0x58] sm:$0xff]
        %v504 = vld [vmem:[%s391 + $0x60] sm:$0xff]
        %v505 = vld [vmem:[%s391 + $0x68] sm:$0xff]
        %v506 = vld [vmem:[%s391 + $0x70] sm:$0xff]
        %v507 = vld [vmem:[%s391 + $0x78] sm:$0xff]
        %v508 = vld [vmem:[%s391 + $0x80] sm:$0xff]
        %v509 = vld [vmem:[%s391 + $0x88] sm:$0xff]
        %v510 = vld [vmem:[%s391 + $0x90] sm:$0xff]
        %v511 = vld [vmem:[%s391 + $0x98] sm:$0xff]
        %v512 = vld [vmem:[%s391 + $0xa0] sm:$0xff]
        %v513 = vld [vmem:[%s391 + $0xa8] sm:$0xff]
        %v514 = vld [vmem:[%s391 + $0xb0] sm:$0xff]
        %v515 = vld [vmem:[%s391 + $0xb8] sm:$0xff]
        %v516 = vld [vmem:[%s391 + $0xc0] sm:$0xff]
        %v517 = vld [vmem:[%s391 + $0xc8] sm:$0xff]
        %v518 = vld [vmem:[%s391 + $0xd0] sm:$0xff]
        %v519 = vld [vmem:[%s391 + $0xd8] sm:$0xff]
        %v520 = vld [vmem:[%s391 + $0xe0] sm:$0xff]
        %v521 = vld [vmem:[%s391 + $0xe8] sm:$0xff]
        %v522 = vld [vmem:[%s391 + $0xf0] sm:$0xff]
        %v523 = vld [vmem:[%s391 + $0xf8] sm:$0xff]
        %v524 = vld [vmem:[%s391 + $0x100] sm:$0xff]
        %v525 = vld [vmem:[%s391 + $0x108] sm:$0xff]
        %v526 = vld [vmem:[%s391 + $0x110] sm:$0xff]
        %v527 = vld [vmem:[%s391 + $0x118] sm:$0xff]
        %v528 = vld [vmem:[%s391 + $0x120] sm:$0xff]
        %v529 = vld [vmem:[%s391 + $0x128] sm:$0xff]
        %v530 = vld [vmem:[%s391 + $0x130] sm:$0xff]
        %v531 = vld [vmem:[%s391 + $0x138] sm:$0xff]
        %v532 = vld [vmem:[%s391 + $0x140] sm:$0xff]
        %v533 = vld [vmem:[%s391 + $0x148] sm:$0xff]
        %v534 = vld [vmem:[%s391 + $0x150] sm:$0xff]
        %v535 = vld [vmem:[%s391 + $0x158] sm:$0xff]
        %v536 = vld [vmem:[%s391 + $0x160] sm:$0xff]
        %v537 = vld [vmem:[%s391 + $0x168] sm:$0xff]
        %v538 = vld [vmem:[%s391 + $0x170] sm:$0xff]
        %v539 = vld [vmem:[%s391 + $0x178] sm:$0xff]
        %v540 = vpack.c.bf16 %v493, %v492
        %v541 = vpack.c.bf16 %v495, %v494
        %v542 = vpack.c.bf16 %v497, %v496
        %v543 = vpack.c.bf16 %v499, %v498
        %v544 = vpack.c.bf16 %v501, %v500
        %v545 = vpack.c.bf16 %v503, %v502
        %v546 = vpack.c.bf16 %v505, %v504
        %v547 = vpack.c.bf16 %v507, %v506
        %v548 = vpack.c.bf16 %v509, %v508
        %v549 = vpack.c.bf16 %v511, %v510
        %v550 = vpack.c.bf16 %v513, %v512
        %v551 = vpack.c.bf16 %v515, %v514
        %v552 = vpack.c.bf16 %v517, %v516
        %v553 = vpack.c.bf16 %v519, %v518
        %v554 = vpack.c.bf16 %v521, %v520
        %v555 = vpack.c.bf16 %v523, %v522
        %v556 = vpack.c.bf16 %v525, %v524
        %v557 = vpack.c.bf16 %v527, %v526
        %v558 = vpack.c.bf16 %v529, %v528
        %v559 = vpack.c.bf16 %v531, %v530
        %v560 = vpack.c.bf16 %v533, %v532
        %v561 = vpack.c.bf16 %v535, %v534
        %v562 = vpack.c.bf16 %v537, %v536
        %v563 = vpack.c.bf16 %v539, %v538
        %v564 = vld [vmem:[%s401] sm:$0xff]
        %v565 = vld [vmem:[%s401 + $0x8] sm:$0xff]
        %v566 = vld [vmem:[%s401 + $0x10] sm:$0xff]
        %v567 = vld [vmem:[%s401 + $0x18] sm:$0xff]
        %v568 = vld [vmem:[%s401 + $0x20] sm:$0xff]
        %v569 = vld [vmem:[%s401 + $0x28] sm:$0xff]
        %v570 = vld [vmem:[%s401 + $0x30] sm:$0xff]
        %v571 = vld [vmem:[%s401 + $0x38] sm:$0xff]
        %v572 = vld [vmem:[%s401 + $0x40] sm:$0xff]
        %v573 = vld [vmem:[%s401 + $0x48] sm:$0xff]
        %v574 = vld [vmem:[%s401 + $0x50] sm:$0xff]
        %v575 = vld [vmem:[%s401 + $0x58] sm:$0xff]
        %v576 = vld [vmem:[%s401 + $0x60] sm:$0xff]
        %v577 = vld [vmem:[%s401 + $0x68] sm:$0xff]
        %v578 = vld [vmem:[%s401 + $0x70] sm:$0xff]
        %v579 = vld [vmem:[%s401 + $0x78] sm:$0xff]
        %v580 = vpack.c.bf16 %v565, %v564
        %v581 = vpack.c.bf16 %v567, %v566
        %v582 = vpack.c.bf16 %v569, %v568
        %v583 = vpack.c.bf16 %v571, %v570
        %v584 = vpack.c.bf16 %v573, %v572
        %v585 = vpack.c.bf16 %v575, %v574
        %v586 = vpack.c.bf16 %v577, %v576
        %v587 = vpack.c.bf16 %v579, %v578
        %v588 = vld [vmem:[%s469] sm:$0x1]
        %v590 = vperm.slane %v588, 0
        %592 = vmatpush.bf16.msra.mxu0 %v587
        %593 = vmatpush.bf16.msra.mxu0 %v586
        %594 = vmatpush.bf16.msra.mxu0 %v585
        %595 = vmatpush.bf16.msra.mxu0 %v584
        %596 = vmatpush.bf16.msra.mxu0 %v583
        %597 = vmatpush.bf16.msra.mxu0 %v582
        %598 = vmatpush.bf16.msra.mxu0 %v581
        %599 = vmatpush.bf16.msra.mxu0 %v580
        %600 = vmatmul.bf16.gmra.mxu0 %v540
        %v601 = vpop.f32.mrf.mxu0
        %v602 = vadd.f32 %v590, %v601
        %v603 = vpop.f32.mrf.mxu0
        %v604 = vadd.f32 %v590, %v603
        %605 = vmatmul.bf16.gmra.mxu0 %v541
        %v606 = vpop.f32.mrf.mxu0
        %v607 = vadd.f32 %v590, %v606
        %v608 = vpop.f32.mrf.mxu0
        %v609 = vadd.f32 %v590, %v608
        %610 = vmatmul.bf16.gmra.mxu0 %v542
        %v611 = vpop.f32.mrf.mxu0
        %v612 = vadd.f32 %v590, %v611
        %v613 = vpop.f32.mrf.mxu0
        %v614 = vadd.f32 %v590, %v613
        %615 = vmatmul.bf16.gmra.mxu0 %v543
        %v616 = vpop.f32.mrf.mxu0
        %v617 = vadd.f32 %v590, %v616
        %v618 = vpop.f32.mrf.mxu0
        %v619 = vadd.f32 %v590, %v618
        %620 = vmatmul.bf16.gmra.mxu0 %v544
        %v621 = vpop.f32.mrf.mxu0
        %v622 = vadd.f32 %v590, %v621
        %v623 = vpop.f32.mrf.mxu0
        %v624 = vadd.f32 %v590, %v623
        %625 = vmatmul.bf16.gmra.mxu0 %v545
        %v626 = vpop.f32.mrf.mxu0
        %v627 = vadd.f32 %v590, %v626
        %v628 = vpop.f32.mrf.mxu0
        %v629 = vadd.f32 %v590, %v628
        %630 = vmatmul.bf16.gmra.mxu0 %v546
        %v631 = vpop.f32.mrf.mxu0
        %v632 = vadd.f32 %v590, %v631
        %v633 = vpop.f32.mrf.mxu0
        %v634 = vadd.f32 %v590, %v633
        %635 = vmatmul.bf16.gmra.mxu0 %v547
        %v636 = vpop.f32.mrf.mxu0
        %v637 = vadd.f32 %v590, %v636
        %v638 = vpop.f32.mrf.mxu0
        %v639 = vadd.f32 %v590, %v638
        %640 = vmatmul.bf16.gmra.mxu0 %v548
        %v641 = vpop.f32.mrf.mxu0
        %v642 = vadd.f32 %v590, %v641
        %v643 = vpop.f32.mrf.mxu0
        %v644 = vadd.f32 %v590, %v643
        %645 = vmatmul.bf16.gmra.mxu0 %v549
        %v646 = vpop.f32.mrf.mxu0
        %v647 = vadd.f32 %v590, %v646
        %v648 = vpop.f32.mrf.mxu0
        %v649 = vadd.f32 %v590, %v648
        %650 = vmatmul.bf16.gmra.mxu0 %v550
        %v651 = vpop.f32.mrf.mxu0
        %v652 = vadd.f32 %v590, %v651
        %v653 = vpop.f32.mrf.mxu0
        %v654 = vadd.f32 %v590, %v653
        %655 = vmatmul.bf16.gmra.mxu0 %v551
        %v656 = vpop.f32.mrf.mxu0
        %v657 = vadd.f32 %v590, %v656
        %v658 = vpop.f32.mrf.mxu0
        %v659 = vadd.f32 %v590, %v658
        %660 = vmatmul.bf16.gmra.mxu0 %v552
        %v661 = vpop.f32.mrf.mxu0
        %v662 = vadd.f32 %v590, %v661
        %v663 = vpop.f32.mrf.mxu0
        %v664 = vadd.f32 %v590, %v663
        %665 = vmatmul.bf16.gmra.mxu0 %v553
        %v666 = vpop.f32.mrf.mxu0
        %v667 = vadd.f32 %v590, %v666
        %v668 = vpop.f32.mrf.mxu0
        %v669 = vadd.f32 %v590, %v668
        %670 = vmatmul.bf16.gmra.mxu0 %v554
        %v671 = vpop.f32.mrf.mxu0
        %v672 = vadd.f32 %v590, %v671
        %v673 = vpop.f32.mrf.mxu0
        %v674 = vadd.f32 %v590, %v673
        %675 = vmatmul.bf16.gmra.mxu0 %v555
        %v676 = vpop.f32.mrf.mxu0
        %v677 = vadd.f32 %v590, %v676
        %v678 = vpop.f32.mrf.mxu0
        %v679 = vadd.f32 %v590, %v678
        %680 = vmatmul.bf16.gmra.mxu0 %v556
        %v681 = vpop.f32.mrf.mxu0
        %v682 = vadd.f32 %v590, %v681
        %v683 = vpop.f32.mrf.mxu0
        %v684 = vadd.f32 %v590, %v683
        %685 = vmatmul.bf16.gmra.mxu0 %v557
        %v686 = vpop.f32.mrf.mxu0
        %v687 = vadd.f32 %v590, %v686
        %v688 = vpop.f32.mrf.mxu0
        %v689 = vadd.f32 %v590, %v688
        %690 = vmatmul.bf16.gmra.mxu0 %v558
        %v691 = vpop.f32.mrf.mxu0
        %v692 = vadd.f32 %v590, %v691
        %v693 = vpop.f32.mrf.mxu0
        %v694 = vadd.f32 %v590, %v693
        %695 = vmatmul.bf16.gmra.mxu0 %v559
        %v696 = vpop.f32.mrf.mxu0
        %v697 = vadd.f32 %v590, %v696
        %v698 = vpop.f32.mrf.mxu0
        %v699 = vadd.f32 %v590, %v698
        %700 = vmatmul.bf16.gmra.mxu0 %v560
        %v701 = vpop.f32.mrf.mxu0
        %v702 = vadd.f32 %v590, %v701
        %v703 = vpop.f32.mrf.mxu0
        %v704 = vadd.f32 %v590, %v703
        %705 = vmatmul.bf16.gmra.mxu0 %v561
        %v706 = vpop.f32.mrf.mxu0
        %v707 = vadd.f32 %v590, %v706
        %v708 = vpop.f32.mrf.mxu0
        %v709 = vadd.f32 %v590, %v708
        %710 = vmatmul.bf16.gmra.mxu0 %v562
        %v711 = vpop.f32.mrf.mxu0
        %v712 = vadd.f32 %v590, %v711
        %v713 = vpop.f32.mrf.mxu0
        %v714 = vadd.f32 %v590, %v713
        %715 = vmatmul.bf16.gmra.mxu0 %v563
        %v716 = vpop.f32.mrf.mxu0
        %v717 = vadd.f32 %v590, %v716
        %v718 = vpop.f32.mrf.mxu0
        %v719 = vadd.f32 %v590, %v718
        %720 = vdwg.mxu0
        %v721 = vld [vmem:[%s381] sm:$0xff]
        %v722 = vld [vmem:[%s381 + $0x8] sm:$0xff]
        %v723 = vld [vmem:[%s381 + $0x10] sm:$0xff]
        %v724 = vld [vmem:[%s381 + $0x18] sm:$0xff]
        %v725 = vld [vmem:[%s381 + $0x20] sm:$0xff]
        %v726 = vld [vmem:[%s381 + $0x28] sm:$0xff]
        %v727 = vld [vmem:[%s381 + $0x30] sm:$0xff]
        %v728 = vld [vmem:[%s381 + $0x38] sm:$0xff]
        %v729 = vld [vmem:[%s381 + $0x40] sm:$0xff]
        %v730 = vld [vmem:[%s381 + $0x48] sm:$0xff]
        %v731 = vld [vmem:[%s381 + $0x50] sm:$0xff]
        %v732 = vld [vmem:[%s381 + $0x58] sm:$0xff]
        %v733 = vld [vmem:[%s381 + $0x60] sm:$0xff]
        %v734 = vld [vmem:[%s381 + $0x68] sm:$0xff]
        %v735 = vld [vmem:[%s381 + $0x70] sm:$0xff]
        %v736 = vld [vmem:[%s381 + $0x78] sm:$0xff]
        %v737 = vld [vmem:[%s381 + $0x80] sm:$0xff]
        %v738 = vld [vmem:[%s381 + $0x88] sm:$0xff]
        %v739 = vld [vmem:[%s381 + $0x90] sm:$0xff]
        %v740 = vld [vmem:[%s381 + $0x98] sm:$0xff]
        %v741 = vld [vmem:[%s381 + $0xa0] sm:$0xff]
        %v742 = vld [vmem:[%s381 + $0xa8] sm:$0xff]
        %v743 = vld [vmem:[%s381 + $0xb0] sm:$0xff]
        %v744 = vld [vmem:[%s381 + $0xb8] sm:$0xff]
        %v745 = vld [vmem:[%s381 + $0xc0] sm:$0xff]
        %v746 = vld [vmem:[%s381 + $0xc8] sm:$0xff]
        %v747 = vld [vmem:[%s381 + $0xd0] sm:$0xff]
        %v748 = vld [vmem:[%s381 + $0xd8] sm:$0xff]
        %v749 = vld [vmem:[%s381 + $0xe0] sm:$0xff]
        %v750 = vld [vmem:[%s381 + $0xe8] sm:$0xff]
        %v751 = vld [vmem:[%s381 + $0xf0] sm:$0xff]
        %v752 = vld [vmem:[%s381 + $0xf8] sm:$0xff]
        %v753 = vld [vmem:[%s381 + $0x100] sm:$0xff]
        %v754 = vld [vmem:[%s381 + $0x108] sm:$0xff]
        %v755 = vld [vmem:[%s381 + $0x110] sm:$0xff]
        %v756 = vld [vmem:[%s381 + $0x118] sm:$0xff]
        %v757 = vld [vmem:[%s381 + $0x120] sm:$0xff]
        %v758 = vld [vmem:[%s381 + $0x128] sm:$0xff]
        %v759 = vld [vmem:[%s381 + $0x130] sm:$0xff]
        %v760 = vld [vmem:[%s381 + $0x138] sm:$0xff]
        %v761 = vld [vmem:[%s381 + $0x140] sm:$0xff]
        %v762 = vld [vmem:[%s381 + $0x148] sm:$0xff]
        %v763 = vld [vmem:[%s381 + $0x150] sm:$0xff]
        %v764 = vld [vmem:[%s381 + $0x158] sm:$0xff]
        %v765 = vld [vmem:[%s381 + $0x160] sm:$0xff]
        %v766 = vld [vmem:[%s381 + $0x168] sm:$0xff]
        %v767 = vld [vmem:[%s381 + $0x170] sm:$0xff]
        %v768 = vld [vmem:[%s381 + $0x178] sm:$0xff]
        %v769 = vpack.c.bf16 %v724, %v721
        %v770 = vpack.c.bf16 %v725, %v722
        %v771 = vpack.c.bf16 %v726, %v723
        %v772 = vpack.c.bf16 %v730, %v727
        %v773 = vpack.c.bf16 %v731, %v728
        %v774 = vpack.c.bf16 %v732, %v729
        %v775 = vpack.c.bf16 %v736, %v733
        %v776 = vpack.c.bf16 %v737, %v734
        %v777 = vpack.c.bf16 %v738, %v735
        %v778 = vpack.c.bf16 %v742, %v739
        %v779 = vpack.c.bf16 %v743, %v740
        %v780 = vpack.c.bf16 %v744, %v741
        %v781 = vpack.c.bf16 %v748, %v745
        %v782 = vpack.c.bf16 %v749, %v746
        %v783 = vpack.c.bf16 %v750, %v747
        %v784 = vpack.c.bf16 %v754, %v751
        %v785 = vpack.c.bf16 %v755, %v752
        %v786 = vpack.c.bf16 %v756, %v753
        %v787 = vpack.c.bf16 %v760, %v757
        %v788 = vpack.c.bf16 %v761, %v758
        %v789 = vpack.c.bf16 %v762, %v759
        %v790 = vpack.c.bf16 %v766, %v763
        %v791 = vpack.c.bf16 %v767, %v764
        %v792 = vpack.c.bf16 %v768, %v765
        %v793 = vld [vmem:[#allocation2] sm:$0xff]
        %v794 = vld [vmem:[#allocation2 + $0x8] sm:$0xff]
        %v795 = vld [vmem:[#allocation2 + $0x10] sm:$0xff]
        %v796 = vld [vmem:[#allocation2 + $0x18] sm:$0xff]
        %v797 = vld [vmem:[#allocation2 + $0x20] sm:$0xff]
        %v798 = vld [vmem:[#allocation2 + $0x28] sm:$0xff]
        %v799 = vld [vmem:[#allocation2 + $0x30] sm:$0xff]
        %v800 = vld [vmem:[#allocation2 + $0x38] sm:$0xff]
        %v801 = vld [vmem:[#allocation2 + $0x40] sm:$0xff]
        %v802 = vld [vmem:[#allocation2 + $0x48] sm:$0xff]
        %v803 = vld [vmem:[#allocation2 + $0x50] sm:$0xff]
        %v804 = vld [vmem:[#allocation2 + $0x58] sm:$0xff]
        %v805 = vld [vmem:[#allocation2 + $0x60] sm:$0xff]
        %v806 = vld [vmem:[#allocation2 + $0x68] sm:$0xff]
        %v807 = vld [vmem:[#allocation2 + $0x70] sm:$0xff]
        %v808 = vld [vmem:[#allocation2 + $0x78] sm:$0xff]
        %v809 = vpack.c.bf16 %v604, %v602
        %v810 = vpack.c.bf16 %v609, %v607
        %v811 = vpack.c.bf16 %v614, %v612
        %v812 = vpack.c.bf16 %v619, %v617
        %v813 = vpack.c.bf16 %v624, %v622
        %v814 = vpack.c.bf16 %v629, %v627
        %v815 = vpack.c.bf16 %v634, %v632
        %v816 = vpack.c.bf16 %v639, %v637
        %v817 = vpack.c.bf16 %v644, %v642
        %v818 = vpack.c.bf16 %v649, %v647
        %v819 = vpack.c.bf16 %v654, %v652
        %v820 = vpack.c.bf16 %v659, %v657
        %v821 = vpack.c.bf16 %v664, %v662
        %v822 = vpack.c.bf16 %v669, %v667
        %v823 = vpack.c.bf16 %v674, %v672
        %v824 = vpack.c.bf16 %v679, %v677
        %v825 = vpack.c.bf16 %v684, %v682
        %v826 = vpack.c.bf16 %v689, %v687
        %v827 = vpack.c.bf16 %v694, %v692
        %v828 = vpack.c.bf16 %v699, %v697
        %v829 = vpack.c.bf16 %v704, %v702
        %v830 = vpack.c.bf16 %v709, %v707
        %v831 = vpack.c.bf16 %v714, %v712
        %v832 = vpack.c.bf16 %v719, %v717
        %833 = vmatpush.bf16.msra.mxu0 %v816
        %834 = vmatpush.bf16.msra.mxu0 %v815
        %835 = vmatpush.bf16.msra.mxu0 %v814
        %836 = vmatpush.bf16.msra.mxu0 %v813
        %837 = vmatpush.bf16.msra.mxu0 %v812
        %838 = vmatpush.bf16.msra.mxu0 %v811
        %839 = vmatpush.bf16.msra.mxu0 %v810
        %840 = vmatpush.bf16.msra.mxu0 %v809
        %841 = vmatmul.bf16.gmra.mxu0 %v769
        %v842 = vpop.f32.mrf.mxu0
        %v843 = vadd.f32 0.0, %v842
        %v844 = vpop.f32.mrf.mxu0
        %v845 = vadd.f32 0.0, %v844
        %846 = vmatmul.bf16.gmra.mxu0 %v772
        %v847 = vpop.f32.mrf.mxu0
        %v848 = vadd.f32 0.0, %v847
        %v849 = vpop.f32.mrf.mxu0
        %v850 = vadd.f32 0.0, %v849
        %851 = vmatmul.bf16.gmra.mxu0 %v775
        %v852 = vpop.f32.mrf.mxu0
        %v853 = vadd.f32 0.0, %v852
        %v854 = vpop.f32.mrf.mxu0
        %v855 = vadd.f32 0.0, %v854
        %856 = vmatmul.bf16.gmra.mxu0 %v778
        %v857 = vpop.f32.mrf.mxu0
        %v858 = vadd.f32 0.0, %v857
        %v859 = vpop.f32.mrf.mxu0
        %v860 = vadd.f32 0.0, %v859
        %861 = vmatmul.bf16.gmra.mxu0 %v781
        %v862 = vpop.f32.mrf.mxu0
        %v863 = vadd.f32 0.0, %v862
        %v864 = vpop.f32.mrf.mxu0
        %v865 = vadd.f32 0.0, %v864
        %866 = vmatmul.bf16.gmra.mxu0 %v784
        %v867 = vpop.f32.mrf.mxu0
        %v868 = vadd.f32 0.0, %v867
        %v869 = vpop.f32.mrf.mxu0
        %v870 = vadd.f32 0.0, %v869
        %871 = vmatmul.bf16.gmra.mxu0 %v787
        %v872 = vpop.f32.mrf.mxu0
        %v873 = vadd.f32 0.0, %v872
        %v874 = vpop.f32.mrf.mxu0
        %v875 = vadd.f32 0.0, %v874
        %876 = vmatmul.bf16.gmra.mxu0 %v790
        %v877 = vpop.f32.mrf.mxu0
        %v878 = vadd.f32 0.0, %v877
        %v879 = vpop.f32.mrf.mxu0
        %v880 = vadd.f32 0.0, %v879
        %881 = vdwg.mxu0
        %882 = vmatpush.bf16.msra.mxu0 %v824
        %883 = vmatpush.bf16.msra.mxu0 %v823
        %884 = vmatpush.bf16.msra.mxu0 %v822
        %885 = vmatpush.bf16.msra.mxu0 %v821
        %886 = vmatpush.bf16.msra.mxu0 %v820
        %887 = vmatpush.bf16.msra.mxu0 %v819
        %888 = vmatpush.bf16.msra.mxu0 %v818
        %889 = vmatpush.bf16.msra.mxu0 %v817
        %890 = vmatmul.bf16.gmra.mxu0 %v770
        %v891 = vpop.f32.mrf.mxu0
        %v892 = vadd.f32 %v843, %v891
        %v893 = vpop.f32.mrf.mxu0
        %v894 = vadd.f32 %v845, %v893
        %895 = vmatmul.bf16.gmra.mxu0 %v773
        %v896 = vpop.f32.mrf.mxu0
        %v897 = vadd.f32 %v848, %v896
        %v898 = vpop.f32.mrf.mxu0
        %v899 = vadd.f32 %v850, %v898
        %900 = vmatmul.bf16.gmra.mxu0 %v776
        %v901 = vpop.f32.mrf.mxu0
        %v902 = vadd.f32 %v853, %v901
        %v903 = vpop.f32.mrf.mxu0
        %v904 = vadd.f32 %v855, %v903
        %905 = vmatmul.bf16.gmra.mxu0 %v779
        %v906 = vpop.f32.mrf.mxu0
        %v907 = vadd.f32 %v858, %v906
        %v908 = vpop.f32.mrf.mxu0
        %v909 = vadd.f32 %v860, %v908
        %910 = vmatmul.bf16.gmra.mxu0 %v782
        %v911 = vpop.f32.mrf.mxu0
        %v912 = vadd.f32 %v863, %v911
        %v913 = vpop.f32.mrf.mxu0
        %v914 = vadd.f32 %v865, %v913
        %915 = vmatmul.bf16.gmra.mxu0 %v785
        %v916 = vpop.f32.mrf.mxu0
        %v917 = vadd.f32 %v868, %v916
        %v918 = vpop.f32.mrf.mxu0
        %v919 = vadd.f32 %v870, %v918
        %920 = vmatmul.bf16.gmra.mxu0 %v788
        %v921 = vpop.f32.mrf.mxu0
        %v922 = vadd.f32 %v873, %v921
        %v923 = vpop.f32.mrf.mxu0
        %v924 = vadd.f32 %v875, %v923
        %925 = vmatmul.bf16.gmra.mxu0 %v791
        %v926 = vpop.f32.mrf.mxu0
        %v927 = vadd.f32 %v878, %v926
        %v928 = vpop.f32.mrf.mxu0
        %v929 = vadd.f32 %v880, %v928
        %930 = vdwg.mxu0
        %931 = vmatpush.bf16.msra.mxu0 %v832
        %932 = vmatpush.bf16.msra.mxu0 %v831
        %933 = vmatpush.bf16.msra.mxu0 %v830
        %934 = vmatpush.bf16.msra.mxu0 %v829
        %935 = vmatpush.bf16.msra.mxu0 %v828
        %936 = vmatpush.bf16.msra.mxu0 %v827
        %937 = vmatpush.bf16.msra.mxu0 %v826
        %938 = vmatpush.bf16.msra.mxu0 %v825
        %939 = vmatmul.bf16.gmra.mxu0 %v771
        %v940 = vpop.f32.mrf.mxu0
        %v941 = vadd.f32 %v892, %v940
        %v942 = vpop.f32.mrf.mxu0
        %v943 = vadd.f32 %v894, %v942
        %944 = vmatmul.bf16.gmra.mxu0 %v774
        %v945 = vpop.f32.mrf.mxu0
        %v946 = vadd.f32 %v897, %v945
        %v947 = vpop.f32.mrf.mxu0
        %v948 = vadd.f32 %v899, %v947
        %949 = vmatmul.bf16.gmra.mxu0 %v777
        %v950 = vpop.f32.mrf.mxu0
        %v951 = vadd.f32 %v902, %v950
        %v952 = vpop.f32.mrf.mxu0
        %v953 = vadd.f32 %v904, %v952
        %954 = vmatmul.bf16.gmra.mxu0 %v780
        %v955 = vpop.f32.mrf.mxu0
        %v956 = vadd.f32 %v907, %v955
        %v957 = vpop.f32.mrf.mxu0
        %v958 = vadd.f32 %v909, %v957
        %959 = vmatmul.bf16.gmra.mxu0 %v783
        %v960 = vpop.f32.mrf.mxu0
        %v961 = vadd.f32 %v912, %v960
        %v962 = vpop.f32.mrf.mxu0
        %v963 = vadd.f32 %v914, %v962
        %964 = vmatmul.bf16.gmra.mxu0 %v786
        %v965 = vpop.f32.mrf.mxu0
        %v966 = vadd.f32 %v917, %v965
        %v967 = vpop.f32.mrf.mxu0
        %v968 = vadd.f32 %v919, %v967
        %969 = vmatmul.bf16.gmra.mxu0 %v789
        %v970 = vpop.f32.mrf.mxu0
        %v971 = vadd.f32 %v922, %v970
        %v972 = vpop.f32.mrf.mxu0
        %v973 = vadd.f32 %v924, %v972
        %974 = vmatmul.bf16.gmra.mxu0 %v792
        %v975 = vpop.f32.mrf.mxu0
        %v976 = vadd.f32 %v927, %v975
        %v977 = vpop.f32.mrf.mxu0
        %v978 = vadd.f32 %v929, %v977
        %979 = vdwg.mxu0
        %v980 = vadd.f32 %v793, %v941
        %v981 = vadd.f32 %v794, %v943
        %v982 = vadd.f32 %v795, %v946
        %v983 = vadd.f32 %v796, %v948
        %v984 = vadd.f32 %v797, %v951
        %v985 = vadd.f32 %v798, %v953
        %v986 = vadd.f32 %v799, %v956
        %v987 = vadd.f32 %v800, %v958
        %v988 = vadd.f32 %v801, %v961
        %v989 = vadd.f32 %v802, %v963
        %v990 = vadd.f32 %v803, %v966
        %v991 = vadd.f32 %v804, %v968
        %v992 = vadd.f32 %v805, %v971
        %v993 = vadd.f32 %v806, %v973
        %v994 = vadd.f32 %v807, %v976
        %v995 = vadd.f32 %v808, %v978
        %996 = vst [vmem:[#allocation2] sm:$0xff] %v980
        %997 = vst [vmem:[#allocation2 + $0x8] sm:$0xff] %v981
        %998 = vst [vmem:[#allocation2 + $0x10] sm:$0xff] %v982
        %999 = vst [vmem:[#allocation2 + $0x18] sm:$0xff] %v983
        %1000 = vst [vmem:[#allocation2 + $0x20] sm:$0xff] %v984
        %1001 = vst [vmem:[#allocation2 + $0x28] sm:$0xff] %v985
        %1002 = vst [vmem:[#allocation2 + $0x30] sm:$0xff] %v986
        %1003 = vst [vmem:[#allocation2 + $0x38] sm:$0xff] %v987
        %1004 = vst [vmem:[#allocation2 + $0x40] sm:$0xff] %v988
        %1005 = vst [vmem:[#allocation2 + $0x48] sm:$0xff] %v989
        %1006 = vst [vmem:[#allocation2 + $0x50] sm:$0xff] %v990
        %1007 = vst [vmem:[#allocation2 + $0x58] sm:$0xff] %v991
        %1008 = vst [vmem:[#allocation2 + $0x60] sm:$0xff] %v992
        %1009 = vst [vmem:[#allocation2 + $0x68] sm:$0xff] %v993
        %1010 = vst [vmem:[#allocation2 + $0x70] sm:$0xff] %v994
        %1011 = vst [vmem:[#allocation2 + $0x78] sm:$0xff] %v995
        %p1012 = scmp.eq.s32.totalorder %s35, 1
        // Predicated region
        $region73: #{tpu_custom_call.1} parent=47 // pred_check
          %p1013 = pneg %p1012
        $region74: #{tpu_custom_call.1} parent=47 // pred_check_branch
          %1015 = sbr.rel (%p1013) target = $region76
        $region75: #{tpu_custom_call.1} parent=47 // pred_region
          %v1016 = vld [vmem:[#allocation2] sm:$0xff]
          %v1017 = vld [vmem:[#allocation2 + $0x8] sm:$0xff]
          %v1018 = vld [vmem:[#allocation2 + $0x10] sm:$0xff]
          %v1019 = vld [vmem:[#allocation2 + $0x18] sm:$0xff]
          %v1020 = vld [vmem:[#allocation2 + $0x20] sm:$0xff]
          %v1021 = vld [vmem:[#allocation2 + $0x28] sm:$0xff]
          %v1022 = vld [vmem:[#allocation2 + $0x30] sm:$0xff]
          %v1023 = vld [vmem:[#allocation2 + $0x38] sm:$0xff]
          %v1024 = vld [vmem:[#allocation2 + $0x40] sm:$0xff]
          %v1025 = vld [vmem:[#allocation2 + $0x48] sm:$0xff]
          %v1026 = vld [vmem:[#allocation2 + $0x50] sm:$0xff]
          %v1027 = vld [vmem:[#allocation2 + $0x58] sm:$0xff]
          %v1028 = vld [vmem:[#allocation2 + $0x60] sm:$0xff]
          %v1029 = vld [vmem:[#allocation2 + $0x68] sm:$0xff]
          %v1030 = vld [vmem:[#allocation2 + $0x70] sm:$0xff]
          %v1031 = vld [vmem:[#allocation2 + $0x78] sm:$0xff]
          %v1032 = vld [vmem:[%s411] sm:$0xff]
          %v1033 = vld [vmem:[%s411 + $0x8] sm:$0xff]
          %v1034 = vld [vmem:[%s411 + $0x10] sm:$0xff]
          %v1035 = vld [vmem:[%s411 + $0x18] sm:$0xff]
          %v1036 = vld [vmem:[%s411 + $0x20] sm:$0xff]
          %v1037 = vld [vmem:[%s411 + $0x28] sm:$0xff]
          %v1038 = vld [vmem:[%s411 + $0x30] sm:$0xff]
          %v1039 = vld [vmem:[%s411 + $0x38] sm:$0xff]
          %v1040 = vld [vmem:[%s411 + $0x40] sm:$0xff]
          %v1041 = vld [vmem:[%s411 + $0x48] sm:$0xff]
          %v1042 = vld [vmem:[%s411 + $0x50] sm:$0xff]
          %v1043 = vld [vmem:[%s411 + $0x58] sm:$0xff]
          %v1044 = vld [vmem:[%s411 + $0x60] sm:$0xff]
          %v1045 = vld [vmem:[%s411 + $0x68] sm:$0xff]
          %v1046 = vld [vmem:[%s411 + $0x70] sm:$0xff]
          %v1047 = vld [vmem:[%s411 + $0x78] sm:$0xff]
          %v1048 = vpack.c.bf16 %v1033, %v1032
          %v1049 = vpack.c.bf16 %v1035, %v1034
          %v1050 = vpack.c.bf16 %v1037, %v1036
          %v1051 = vpack.c.bf16 %v1039, %v1038
          %v1052 = vpack.c.bf16 %v1041, %v1040
          %v1053 = vpack.c.bf16 %v1043, %v1042
          %v1054 = vpack.c.bf16 %v1045, %v1044
          %v1055 = vpack.c.bf16 %v1047, %v1046
          %v1056 = vld [vmem:[#allocation11] sm:$0xff]
          %v1057 = vld [vmem:[#allocation11 + $0x8] sm:$0xff]
          %v1058 = vld [vmem:[#allocation11 + $0x10] sm:$0xff]
          %v1059 = vld [vmem:[#allocation11 + $0x18] sm:$0xff]
          %v1060 = vld [vmem:[#allocation11 + $0x20] sm:$0xff]
          %v1061 = vld [vmem:[#allocation11 + $0x28] sm:$0xff]
          %v1062 = vld [vmem:[#allocation11 + $0x30] sm:$0xff]
          %v1063 = vld [vmem:[#allocation11 + $0x38] sm:$0xff]
          %v1064 = vld [vmem:[#allocation11 + $0x40] sm:$0xff]
          %v1065 = vld [vmem:[#allocation11 + $0x48] sm:$0xff]
          %v1066 = vld [vmem:[#allocation11 + $0x50] sm:$0xff]
          %v1067 = vld [vmem:[#allocation11 + $0x58] sm:$0xff]
          %v1068 = vld [vmem:[#allocation11 + $0x60] sm:$0xff]
          %v1069 = vld [vmem:[#allocation11 + $0x68] sm:$0xff]
          %v1070 = vld [vmem:[#allocation11 + $0x70] sm:$0xff]
          %v1071 = vld [vmem:[#allocation11 + $0x78] sm:$0xff]
          %v1072 = vpack.c.bf16 %v1057, %v1056
          %v1073 = vpack.c.bf16 %v1059, %v1058
          %v1074 = vpack.c.bf16 %v1061, %v1060
          %v1075 = vpack.c.bf16 %v1063, %v1062
          %v1076 = vpack.c.bf16 %v1065, %v1064
          %v1077 = vpack.c.bf16 %v1067, %v1066
          %v1078 = vpack.c.bf16 %v1069, %v1068
          %v1079 = vpack.c.bf16 %v1071, %v1070
          %1080 = vmatpush.bf16.msra.mxu0 %v1079
          %1081 = vmatpush.bf16.msra.mxu0 %v1078
          %1082 = vmatpush.bf16.msra.mxu0 %v1077
          %1083 = vmatpush.bf16.msra.mxu0 %v1076
          %1084 = vmatpush.bf16.msra.mxu0 %v1075
          %1085 = vmatpush.bf16.msra.mxu0 %v1074
          %1086 = vmatpush.bf16.msra.mxu0 %v1073
          %1087 = vmatpush.bf16.msra.mxu0 %v1072
          %1088 = vmatmul.bf16.gmra.mxu0 %v1048
          %v1089 = vpop.f32.mrf.mxu0
          %v1090 = vadd.f32 0.0, %v1089
          %v1091 = vpop.f32.mrf.mxu0
          %v1092 = vadd.f32 0.0, %v1091
          %1093 = vmatmul.bf16.gmra.mxu0 %v1049
          %v1094 = vpop.f32.mrf.mxu0
          %v1095 = vadd.f32 0.0, %v1094
          %v1096 = vpop.f32.mrf.mxu0
          %v1097 = vadd.f32 0.0, %v1096
          %1098 = vmatmul.bf16.gmra.mxu0 %v1050
          %v1099 = vpop.f32.mrf.mxu0
          %v1100 = vadd.f32 0.0, %v1099
          %v1101 = vpop.f32.mrf.mxu0
          %v1102 = vadd.f32 0.0, %v1101
          %1103 = vmatmul.bf16.gmra.mxu0 %v1051
          %v1104 = vpop.f32.mrf.mxu0
          %v1105 = vadd.f32 0.0, %v1104
          %v1106 = vpop.f32.mrf.mxu0
          %v1107 = vadd.f32 0.0, %v1106
          %1108 = vmatmul.bf16.gmra.mxu0 %v1052
          %v1109 = vpop.f32.mrf.mxu0
          %v1110 = vadd.f32 0.0, %v1109
          %v1111 = vpop.f32.mrf.mxu0
          %v1112 = vadd.f32 0.0, %v1111
          %1113 = vmatmul.bf16.gmra.mxu0 %v1053
          %v1114 = vpop.f32.mrf.mxu0
          %v1115 = vadd.f32 0.0, %v1114
          %v1116 = vpop.f32.mrf.mxu0
          %v1117 = vadd.f32 0.0, %v1116
          %1118 = vmatmul.bf16.gmra.mxu0 %v1054
          %v1119 = vpop.f32.mrf.mxu0
          %v1120 = vadd.f32 0.0, %v1119
          %v1121 = vpop.f32.mrf.mxu0
          %v1122 = vadd.f32 0.0, %v1121
          %1123 = vmatmul.bf16.gmra.mxu0 %v1055
          %v1124 = vpop.f32.mrf.mxu0
          %v1125 = vadd.f32 0.0, %v1124
          %v1126 = vpop.f32.mrf.mxu0
          %v1127 = vadd.f32 0.0, %v1126
          %1128 = vdwg.mxu0
          %v1129 = vadd.f32 %v1016, %v1090
          %v1130 = vadd.f32 %v1017, %v1092
          %v1131 = vadd.f32 %v1018, %v1095
          %v1132 = vadd.f32 %v1019, %v1097
          %v1133 = vadd.f32 %v1020, %v1100
          %v1134 = vadd.f32 %v1021, %v1102
          %v1135 = vadd.f32 %v1022, %v1105
          %v1136 = vadd.f32 %v1023, %v1107
          %v1137 = vadd.f32 %v1024, %v1110
          %v1138 = vadd.f32 %v1025, %v1112
          %v1139 = vadd.f32 %v1026, %v1115
          %v1140 = vadd.f32 %v1027, %v1117
          %v1141 = vadd.f32 %v1028, %v1120
          %v1142 = vadd.f32 %v1029, %v1122
          %v1143 = vadd.f32 %v1030, %v1125
          %v1144 = vadd.f32 %v1031, %v1127
          %v1145 = vld [vmem:[%s6] sm:$0x1]
          %v1147 = vperm.slane %v1145, 0
          %v1149 = vadd.f32 %v1129, %v1147
          %v1150 = vadd.f32 %v1130, %v1147
          %v1151 = vadd.f32 %v1131, %v1147
          %v1152 = vadd.f32 %v1132, %v1147
          %v1153 = vadd.f32 %v1133, %v1147
          %v1154 = vadd.f32 %v1134, %v1147
          %v1155 = vadd.f32 %v1135, %v1147
          %v1156 = vadd.f32 %v1136, %v1147
          %v1157 = vadd.f32 %v1137, %v1147
          %v1158 = vadd.f32 %v1138, %v1147
          %v1159 = vadd.f32 %v1139, %v1147
          %v1160 = vadd.f32 %v1140, %v1147
          %v1161 = vadd.f32 %v1141, %v1147
          %v1162 = vadd.f32 %v1142, %v1147
          %v1163 = vadd.f32 %v1143, %v1147
          %v1164 = vadd.f32 %v1144, %v1147
          %vm1165 = vcmp.ge.f32.partialorder %v1149, 0.0
          %vm1166 = vcmp.ge.f32.partialorder %v1150, 0.0
          %vm1167 = vcmp.ge.f32.partialorder %v1151, 0.0
          %vm1168 = vcmp.ge.f32.partialorder %v1152, 0.0
          %vm1169 = vcmp.ge.f32.partialorder %v1153, 0.0
          %vm1170 = vcmp.ge.f32.partialorder %v1154, 0.0
          %vm1171 = vcmp.ge.f32.partialorder %v1155, 0.0
          %vm1172 = vcmp.ge.f32.partialorder %v1156, 0.0
          %vm1173 = vcmp.ge.f32.partialorder %v1157, 0.0
          %vm1174 = vcmp.ge.f32.partialorder %v1158, 0.0
          %vm1175 = vcmp.ge.f32.partialorder %v1159, 0.0
          %vm1176 = vcmp.ge.f32.partialorder %v1160, 0.0
          %vm1177 = vcmp.ge.f32.partialorder %v1161, 0.0
          %vm1178 = vcmp.ge.f32.partialorder %v1162, 0.0
          %vm1179 = vcmp.ge.f32.partialorder %v1163, 0.0
          %vm1180 = vcmp.ge.f32.partialorder %v1164, 0.0
          %v1181 = vmul.f32 %v1149, 0.01
          %v1182 = vmul.f32 %v1150, 0.01
          %v1183 = vmul.f32 %v1151, 0.01
          %v1184 = vmul.f32 %v1152, 0.01
          %v1185 = vmul.f32 %v1153, 0.01
          %v1186 = vmul.f32 %v1154, 0.01
          %v1187 = vmul.f32 %v1155, 0.01
          %v1188 = vmul.f32 %v1156, 0.01
          %v1189 = vmul.f32 %v1157, 0.01
          %v1190 = vmul.f32 %v1158, 0.01
          %v1191 = vmul.f32 %v1159, 0.01
          %v1192 = vmul.f32 %v1160, 0.01
          %v1193 = vmul.f32 %v1161, 0.01
          %v1194 = vmul.f32 %v1162, 0.01
          %v1195 = vmul.f32 %v1163, 0.01
          %v1196 = vmul.f32 %v1164, 0.01
          %v1197 = vsel %vm1165, %v1149, %v1181
          %v1198 = vsel %vm1166, %v1150, %v1182
          %v1199 = vsel %vm1167, %v1151, %v1183
          %v1200 = vsel %vm1168, %v1152, %v1184
          %v1201 = vsel %vm1169, %v1153, %v1185
          %v1202 = vsel %vm1170, %v1154, %v1186
          %v1203 = vsel %vm1171, %v1155, %v1187
          %v1204 = vsel %vm1172, %v1156, %v1188
          %v1205 = vsel %vm1173, %v1157, %v1189
          %v1206 = vsel %vm1174, %v1158, %v1190
          %v1207 = vsel %vm1175, %v1159, %v1191
          %v1208 = vsel %vm1176, %v1160, %v1192
          %v1209 = vsel %vm1177, %v1161, %v1193
          %v1210 = vsel %vm1178, %v1162, %v1194
          %v1211 = vsel %vm1179, %v1163, %v1195
          %v1212 = vsel %vm1180, %v1164, %v1196
          %1213 = vst [vmem:[%s465] sm:$0xff] %v1197
          %1214 = vst [vmem:[%s465 + $0x8] sm:$0xff] %v1198
          %1215 = vst [vmem:[%s465 + $0x10] sm:$0xff] %v1199
          %1216 = vst [vmem:[%s465 + $0x18] sm:$0xff] %v1200
          %1217 = vst [vmem:[%s465 + $0x20] sm:$0xff] %v1201
          %1218 = vst [vmem:[%s465 + $0x28] sm:$0xff] %v1202
          %1219 = vst [vmem:[%s465 + $0x30] sm:$0xff] %v1203
          %1220 = vst [vmem:[%s465 + $0x38] sm:$0xff] %v1204
          %1221 = vst [vmem:[%s465 + $0x40] sm:$0xff] %v1205
          %1222 = vst [vmem:[%s465 + $0x48] sm:$0xff] %v1206
          %1223 = vst [vmem:[%s465 + $0x50] sm:$0xff] %v1207
          %1224 = vst [vmem:[%s465 + $0x58] sm:$0xff] %v1208
          %1225 = vst [vmem:[%s465 + $0x60] sm:$0xff] %v1209
          %1226 = vst [vmem:[%s465 + $0x68] sm:$0xff] %v1210
          %1227 = vst [vmem:[%s465 + $0x70] sm:$0xff] %v1211
          %1228 = vst [vmem:[%s465 + $0x78] sm:$0xff] %v1212
        $region76: #{tpu_custom_call.1} parent=47 // pred_fallthru
          _
        %s1229 = sand.u32 %s224, 1
        %s1230 = scalar_lea.sflag [#allocation5], %s1229
        %s1231 = sand.u32 %s224, 1
        %s1232 = smul.addr %s1231, 128
        %s1233 = scalar_lea.vmem [#allocation12], %s1232
        // Predicated region
        $region77: #{tpu_custom_call.1} parent=47 // pred_check
          %p1234 = pneg %p234
        $region78: #{tpu_custom_call.1} parent=47 // pred_check_branch
          %1236 = sbr.rel (%p1234) target = $region80
        $region79: #{tpu_custom_call.1} parent=47 // pred_region
          %s1237 = smul.u32 16, %s34
          %1239 = vsyncadd %s1230, 0
          %s1240 = smul.addr %s1237, 8
          %s1241 = scalar_lea.hbm %s7, %s1240
          %s1242 = sshll.u32 %s1233, 4
          %s1243 = int_to_ptr.vmem [resolvable:$true] %s1242
          %s1244 = sshll.u32 %s1241, 4
          %s1245 = int_to_ptr.hbm [resolvable:$true] %s1244
          %1250 = dma.vmem_to_hbm [thread:$0]  %s1243, 2048, %s1245, %s1230, 128, 128, 8
        $region80: #{tpu_custom_call.1} parent=47 // pred_fallthru
          _
      $region48: #{tpu_custom_call.1} parent=5 // pred_fallthru
        _
      %p1251 = scmp.le.s32.totalorder 2, %s25
      // Predicated region
      $region81: #{tpu_custom_call.1} parent=5 // pred_check
        %p1252 = pneg %p1251
      $region82: #{tpu_custom_call.1} parent=5 // pred_check_branch
        %1254 = sbr.rel (%p1252) target = $region84
      $region83: #{tpu_custom_call.1} parent=5 // pred_region
        %s1255 = ssub.s32 %s25, 2
        // Predicated region
        $region85: #{tpu_custom_call.1} parent=83 // pred_check
          %p1256 = pneg %p240
        $region86: #{tpu_custom_call.1} parent=83 // pred_check_branch
          %1258 = sbr.rel (%p1256) target = $region88
        $region87: #{tpu_custom_call.1} parent=83 // pred_region
          %s1259 = sand.u32 %s225, 1
          %s1260 = scalar_lea.sflag [#allocation5], %s1259
          %s1261 = sand.u32 %s225, 1
          %s1262 = smul.addr %s1261, 128
          %s1263 = scalar_lea.vmem [#allocation12], %s1262
          %1265 = dma.done %s1260, 2048
        $region88: #{tpu_custom_call.1} parent=83 // pred_fallthru
          _
      $region84: #{tpu_custom_call.1} parent=5 // pred_fallthru
        _
    $region6: #{tpu_custom_call.1} parent=1 // loop_footer
      %s29 = sadd.s32 1, %s25
    $region7: #{tpu_custom_call.1} parent=1 // loop_footer_branch
      %24 = sbr.rel target = $region3
    $region8: #{tpu_custom_call.1} parent=1 // loop_exit
      _
    %1266 = vsyncpa [#allocation4], 1
    %s1267 = scalar_lea.sflag [#allocation4], 1
    %1268 = vsyncpa %s1267, 1
    %1269 = vsyncpa [#allocation7], 1
    %s1270 = scalar_lea.sflag [#allocation7], 1
    %1271 = vsyncpa %s1270, 1
    %1272 = vsyncpa [#allocation10], 1
    %s1273 = scalar_lea.sflag [#allocation10], 1
    %1274 = vsyncpa %s1273, 1
    %1275 = vsyncpa [#allocation5], 1
    %s1276 = scalar_lea.sflag [#allocation5], 1
    %1277 = vsyncpa %s1276, 1

</llo_original>
